<compile_context>
chip_gen: v7x
topology: tpu7x:2x2x1
jax: 0.10.0
libtpu: 0.0.40
codegen_flags: <defaults>
</compile_context>

<pallas_src>
import functools

import jax
import jax.numpy as jnp
from jax.experimental import pallas as pl
from jax.experimental.pallas import tpu as pltpu

_LANE = 128


def _round_up(v, m):
    return -(-v // m) * m


def _cdiv(a, b):
    return -(-a // b)


def _vmem_config():
    """(vmem_limit_bytes, live-block budget) keyed off physical VMEM capacity."""
    try:
        cap = int(pltpu.get_tpu_info().vmem_capacity_bytes)
    except Exception:
        cap = 64 * 1024 * 1024  # conservative: assume a 64 MiB-VMEM part
    if cap >= 128 * 1024 * 1024:          # v5e / v6e class (128 MiB physical)
        return 64 * 1024 * 1024, 40 * 1024 * 1024
    return 48 * 1024 * 1024, 24 * 1024 * 1024   # v7x class (64 MiB physical)


def _pick_tile_n(P, Cin, Cout, itemsize, budget_bytes, last_layer):
    """Pillars per grid step, sized against the double-buffered live blocks."""
    pad = lambda v: _round_up(v, _LANE)
    if last_layer:
        const = 2 * Cin * pad(Cout) * itemsize                 # weight (double-buffered)
        row = (2 * P * pad(Cin) * itemsize                     # x rows block
               + 2 * pad(Cout) * itemsize                      # max output
               + 3 * P * pad(Cout) * 4)                        # f32 y + reduce temporaries
    else:
        const = 2 * (P * Cin) * pad(P * Cout) * itemsize       # block-diag weight
        row = (2 * pad(P * Cin) * itemsize                     # x block
               + 2 * pad(P * Cout) * itemsize                  # y slab output
               + 2 * pad(Cout) * itemsize                      # max output
               + 3 * pad(P * Cout) * 4)                        # f32 slab + max-tree temps
    avail = max(budget_bytes - const, 8 * row)
    return int(max(8, min(1024, (avail // row) // 8 * 8)))


def _target_grid_steps(tile_n, N, min_steps=4):
    """Keep >= min_steps grid steps when N allows (>= 2 steps per v7x TensorCore,
    so BlockSpec double-buffering can overlap DMA with compute)."""
    steps = min(min_steps, max(1, _cdiv(N, 8)))
    if _cdiv(N, tile_n) < steps:
        tile_n = max(8, _round_up(_cdiv(N, steps), 8))
    return tile_n


def _pfn_slab_kernel(x_ref, wbd_ref, shift_ref, y_ref, max_ref, *, P, Cout):
    """Non-last layer, one grid step over tile_n pillars.

    x_ref:     (tile_n, P*Cin)   lane-dense flattened pillar points
    wbd_ref:   (P*Cin, P*Cout)   block-diagonal replicated weight (scale folded in)
    shift_ref: (1, P*Cout) f32   tiled BN shift / bias
    y_ref:     (tile_n, P*Cout)  relu(bn(linear(x))) slab (lane-dense store)
    max_ref:   (tile_n, Cout)    per-pillar channel max
    """
    # One full-width MXU matmul produces the whole lane-aligned output slab.
    slab = jnp.dot(x_ref[...], wbd_ref[...], preferred_element_type=jnp.float32)
    slab = jnp.maximum(slab + shift_ref[...], 0.0)
    slab = slab.astype(y_ref.dtype)          # max computed post-cast: agrees with stored y
    y_ref[...] = slab

    # Per-pillar channel max: lane-halving tree over the P point blocks
    # (elementwise VPU maxes on 128-lane-aligned halves for power-of-two P).
    cur, nb, pending = slab, P, []
    while nb > 1:
        if nb % 2:
            pending.append(cur[:, (nb - 1) * Cout:])
            cur = cur[:, : (nb - 1) * Cout]
            nb -= 1
        half = (nb // 2) * Cout
        cur = jnp.maximum(cur[:, :half], cur[:, half:])
        nb //= 2
    for tail in pending:
        cur = jnp.maximum(cur, tail)
    max_ref[...] = cur.astype(max_ref.dtype)


def _pfn_last_kernel(x_ref, w_ref, shift_ref, max_ref, *, P):
    """Last layer, one grid step over tile_n pillars.

    x_ref:     (tile_n*P, Cin)   pillar points as rows (big-M matmul)
    w_ref:     (Cin, Cout)       weight with scale folded in
    shift_ref: (1, Cout) f32
    max_ref:   (tile_n, Cout)    per-pillar channel max
    """
    tile_n, Cout = max_ref.shape
    y = jnp.dot(x_ref[...], w_ref[...], preferred_element_type=jnp.float32)
    y = jnp.maximum(y + shift_ref[...], 0.0)              # (tile_n*P, Cout) f32
    # Sublane reduce over the P points of each pillar (XLU slot has slack).
    m = jnp.max(y.reshape(tile_n, P, Cout), axis=1)
    max_ref[...] = m.astype(max_ref.dtype)


def pfn_layer_forward(x, w_t, scale, shift, *, last_layer=False, tile_n=None,
                      return_split=False):
    """PFNLayer forward.

    x:      (N, P, Cin)  pillar point features (f32 or bf16).
    w_t:    (Cin, Cout)  nn.Linear weight, pre-transposed.
    scale, shift: (Cout,) folded inference BatchNorm (or scale=1, shift=bias).

    Returns:
      last_layer=False: (N, P, 2*Cout) concat([y, max]) like the module, or
                        (y (N,P,Cout), y_max (N,Cout)) when return_split=True.
      last_layer=True:  (N, 1, Cout).
    """
    N, P, Cin = x.shape
    Cin_w, Cout = w_t.shape
    assert Cin_w == Cin, "weight / input channel mismatch"
    dtype = x.dtype
    itemsize = jnp.dtype(dtype).itemsize

    scale = jnp.asarray(scale, jnp.float32).reshape(1, Cout)
    shift = jnp.asarray(shift, jnp.float32).reshape(1, Cout)
    # Fold BN scale into the weight in f32 BEFORE any low-precision cast; the
    # in-kernel epilogue is then a single add + relu.
    w_s = w_t.astype(jnp.float32) * scale

    vmem_limit, vmem_budget = _vmem_config()
    if tile_n is None:
        tile_n = _pick_tile_n(P, Cin, Cout, itemsize, vmem_budget, last_layer)
    tile_n = max(8, (int(tile_n) // 8) * 8)
    tile_n = min(tile_n, _round_up(N, 8))
    tile_n = _target_grid_steps(tile_n, N)

    grid_n = _cdiv(N, tile_n)
    n_pad = grid_n * tile_n
    if n_pad != N:
        # Padded pillar rows compute relu(shift) inside the kernel; they are
        # sliced off below.  Do NOT consume the padded rows directly.
        x = jnp.pad(x, ((0, n_pad - N), (0, 0), (0, 0)))

    params = pltpu.CompilerParams(
        dimension_semantics=("parallel",),
        vmem_limit_bytes=vmem_limit,
    )

    if last_layer:
        x_rows = x.reshape(n_pad * P, Cin)                 # free row-major fold
        w = w_s.astype(dtype)
        out = pl.pallas_call(
            functools.partial(_pfn_last_kernel, P=P),
            out_shape=jax.ShapeDtypeStruct((n_pad, Cout), dtype),
            grid=(grid_n,),
            in_specs=[
                pl.BlockSpec((tile_n * P, Cin), lambda i: (i, 0)),
                pl.BlockSpec((Cin, Cout), lambda i: (0, 0)),
                pl.BlockSpec((1, Cout), lambda i: (0, 0)),
            ],
            out_specs=pl.BlockSpec((tile_n, Cout), lambda i: (i, 0)),
            compiler_params=params,
        )(x_rows, w, shift)
        return out[:N][:, None, :]                         # (N, 1, Cout), keepdim like torch

    # Non-last layer: lane-dense flattened input + block-diagonal replicated weight.
    x_flat = x.reshape(n_pad, P * Cin)
    w_bd = jnp.kron(jnp.eye(P, dtype=jnp.float32), w_s).astype(dtype)   # (P*Cin, P*Cout)
    shift_tiled = jnp.tile(shift, (1, P))                                # (1, P*Cout)

    y_flat, y_max = pl.pallas_call(
        functools.partial(_pfn_slab_kernel, P=P, Cout=Cout),
        out_shape=(
            jax.ShapeDtypeStruct((n_pad, P * Cout), dtype),   # lane-dense y slab
            jax.ShapeDtypeStruct((n_pad, Cout), dtype),       # per-pillar max
        ),
        grid=(grid_n,),
        in_specs=[
            pl.BlockSpec((tile_n, P * Cin), lambda i: (i, 0)),
            pl.BlockSpec((P * Cin, P * Cout), lambda i: (0, 0)),
            pl.BlockSpec((1, P * Cout), lambda i: (0, 0)),
        ],
        out_specs=(
            pl.BlockSpec((tile_n, P * Cout), lambda i: (i, 0)),
            pl.BlockSpec((tile_n, Cout), lambda i: (i, 0)),
        ),
        compiler_params=params,
    )(x_flat, w_bd, shift_tiled)

    y = y_flat[:N].reshape(N, P, Cout)
    y_max = y_max[:N]
    if return_split:
        return y, y_max
    # Module-exact output: the P-way repeat of the max + concat is pure data
    # duplication, done consumer-side so the kernel writes ~half the bytes.
    return jnp.concatenate(
        [y, jnp.broadcast_to(y_max[:, None, :], (N, P, Cout))], axis=-1)


def _reference_forward(x, w_t, scale, shift, last_layer):
    x = x.astype(jnp.float32)
    y = jnp.matmul(x, w_t.astype(jnp.float32), precision=jax.lax.Precision.HIGHEST)
    y = y * scale.reshape(1, 1, -1) + shift.reshape(1, 1, -1)
    y = jnp.maximum(y, 0.0)
    y_max = jnp.max(y, axis=1, keepdims=True)
    if last_layer:
        return y_max
    return jnp.concatenate([y, jnp.broadcast_to(y_max, y.shape)], axis=-1)


if __name__ == "__main__":
    key = jax.random.PRNGKey(0)
    N, P = 50, 32                        # N=50 exercises the pad / ragged-N path
    Cin1, out_ch = 10, 64
    Cout1 = out_ch // 2                  # non-last layer halves out_channels -> 32
    Cin2, Cout2 = 2 * Cout1, 64          # last layer consumes the concat output

    ks = jax.random.split(key, 12)
    eps = 1e-3

    def make_params(kw, kg, kb, km, kv, cin, cout, use_norm=True):
        W = jax.random.uniform(kw, (cout, cin), jnp.float32, -0.3, 0.3)
        if use_norm:
            gamma = jax.random.uniform(kg, (cout,), jnp.float32, 0.5, 1.5)
            beta = 0.1 * jax.random.normal(kb, (cout,), jnp.float32)
            mean = 0.1 * jax.random.normal(km, (cout,), jnp.float32)
            var = jax.random.uniform(kv, (cout,), jnp.float32, 0.5, 1.5)
            s = gamma / jnp.sqrt(var + eps)
            b = beta - mean * s
        else:
            s = jnp.ones((cout,), jnp.float32)
            b = 0.1 * jax.random.normal(kb, (cout,), jnp.float32)
        return W.T, s, b                  # (cin, cout), (cout,), (cout,)

    w1, s1, b1 = make_params(ks[0], ks[1], ks[2], ks[3], ks[4], Cin1, Cout1)
    w2, s2, b2 = make_params(ks[5], ks[6], ks[7], ks[8], ks[9], Cin2, Cout2)
    x = jax.random.normal(ks[10], (N, P, Cin1), jnp.float32)

    # Layer 1: non-last (concat path), f32.
    out1 = jax.block_until_ready(pfn_layer_forward(x, w1, s1, b1, last_layer=False))
    ref1 = _reference_forward(x, w1, s1, b1, last_layer=False)
    assert out1.shape == (N, P, 2 * Cout1)
    assert jnp.allclose(out1, ref1, atol=2e-3, rtol=2e-3), "layer1 f32 mismatch"

    # Split-output form (for a fused consumer): y and per-pillar max.
    y_sp, m_sp = pfn_layer_forward(x, w1, s1, b1, last_layer=False, return_split=True)
    y_sp, m_sp = jax.block_until_ready((y_sp, m_sp))
    assert jnp.allclose(y_sp, ref1[..., :Cout1], atol=2e-3, rtol=2e-3)
    assert jnp.allclose(m_sp, ref1[:, 0, Cout1:], atol=2e-3, rtol=2e-3)

    # Layer 2: last layer (max-only path), fed by layer 1's output.
    out2 = jax.block_until_ready(pfn_layer_forward(out1, w2, s2, b2, last_layer=True))
    ref2 = _reference_forward(out1, w2, s2, b2, last_layer=True)
    assert out2.shape == (N, 1, Cout2)
    assert jnp.allclose(out2, ref2, atol=2e-3, rtol=2e-3), "layer2 f32 mismatch"

    # bf16 I/O (f32 MXU accumulation + f32 epilogue in-kernel).
    out1_bf16 = jax.block_until_ready(
        pfn_layer_forward(x.astype(jnp.bfloat16), w1.astype(jnp.bfloat16), s1, b1,
                          last_layer=False))
    assert out1_bf16.dtype == jnp.bfloat16
    assert jnp.allclose(out1_bf16.astype(jnp.float32), ref1, atol=7e-2, rtol=7e-2), \
        "layer1 bf16 mismatch"

    print("KERNEL_OK")
</pallas_src>

<mosaic_0001>
module attributes {stable_mosaic.version = 11 : i64} {
  func.func @_pfn_slab_kernel(%arg0: i32, %arg1: memref<16x320xf32, #tpu.memory_space<vmem>>, %arg2: memref<320x1024xf32, #tpu.memory_space<vmem>>, %arg3: memref<1x1024xf32, #tpu.memory_space<vmem>>, %arg4: memref<16x1024xf32, #tpu.memory_space<vmem>>, %arg5: memref<16x32xf32, #tpu.memory_space<vmem>>) attributes {dimension_semantics = [#tpu.dimension_semantics<parallel>], iteration_bounds = array<i64: 4>, scalar_prefetch = 0 : i64, scratch_operands = 0 : i64, tpu.core_type = #tpu.core_type<tc>, window_params = [{transform_indices = @transform_0, window_bounds = array<i64: 16, 320>}, {pipeline_mode = #tpu.pipeline_mode<synchronous>, transform_indices = @transform_1, window_bounds = array<i64: 320, 1024>}, {pipeline_mode = #tpu.pipeline_mode<synchronous>, transform_indices = @transform_2, window_bounds = array<i64: 1, 1024>}, {transform_indices = @transform_3, window_bounds = array<i64: 16, 1024>}, {transform_indices = @transform_4, window_bounds = array<i64: 16, 32>}]} {
    %c0 = arith.constant 0 : index
    %c0_0 = arith.constant 0 : index
    %0 = vector.load %arg1[%c0, %c0_0] : memref<16x320xf32, #tpu.memory_space<vmem>>, vector<16x320xf32>
    %c0_1 = arith.constant 0 : index
    %c0_2 = arith.constant 0 : index
    %1 = vector.load %arg2[%c0_1, %c0_2] : memref<320x1024xf32, #tpu.memory_space<vmem>>, vector<320x1024xf32>
    %cst = arith.constant dense<0.000000e+00> : vector<16x1024xf32>
    %2 = tpu.matmul %0, %1, %cst {dimension_numbers = #tpu.dot_dimension_numbers<[1], [0], [0], [1], [0, 0, 1, 1], [], []>} : vector<16x320xf32>, vector<320x1024xf32>, vector<16x1024xf32> -> vector<16x1024xf32>
    %c0_3 = arith.constant 0 : index
    %c0_4 = arith.constant 0 : index
    %3 = vector.load %arg3[%c0_3, %c0_4] : memref<1x1024xf32, #tpu.memory_space<vmem>>, vector<1x1024xf32>
    %4 = vector.broadcast %3 : vector<1x1024xf32> to vector<16x1024xf32>
    %5 = arith.addf %2, %4 : vector<16x1024xf32>
    %cst_5 = arith.constant 0.000000e+00 : f32
    %6 = vector.broadcast %cst_5 : f32 to vector<16x1024xf32>
    %7 = arith.maximumf %5, %6 : vector<16x1024xf32>
    %c0_6 = arith.constant 0 : index
    %c0_7 = arith.constant 0 : index
    %8 = vector.load %arg4[%c0_6, %c0_7] : memref<16x1024xf32, #tpu.memory_space<vmem>>, vector<16x1024xf32>
    tpu.vector_store %arg4[%c0_6, %c0_7], %7 {strides = array<i32>} : memref<16x1024xf32, #tpu.memory_space<vmem>>, vector<16x1024xf32>,
    %9 = vector.extract_strided_slice %7 {offsets = [0, 0], sizes = [16, 512], strides = [1, 1]} : vector<16x1024xf32> to vector<16x512xf32>
    %10 = vector.extract_strided_slice %7 {offsets = [0, 512], sizes = [16, 512], strides = [1, 1]} : vector<16x1024xf32> to vector<16x512xf32>
    %11 = arith.maximumf %9, %10 : vector<16x512xf32>
    %12 = vector.extract_strided_slice %11 {offsets = [0, 0], sizes = [16, 256], strides = [1, 1]} : vector<16x512xf32> to vector<16x256xf32>
    %13 = vector.extract_strided_slice %11 {offsets = [0, 256], sizes = [16, 256], strides = [1, 1]} : vector<16x512xf32> to vector<16x256xf32>
    %14 = arith.maximumf %12, %13 : vector<16x256xf32>
    %15 = vector.extract_strided_slice %14 {offsets = [0, 0], sizes = [16, 128], strides = [1, 1]} : vector<16x256xf32> to vector<16x128xf32>
    %16 = vector.extract_strided_slice %14 {offsets = [0, 128], sizes = [16, 128], strides = [1, 1]} : vector<16x256xf32> to vector<16x128xf32>
    %17 = arith.maximumf %15, %16 : vector<16x128xf32>
    %18 = vector.extract_strided_slice %17 {offsets = [0, 0], sizes = [16, 64], strides = [1, 1]} : vector<16x128xf32> to vector<16x64xf32>
    %19 = vector.extract_strided_slice %17 {offsets = [0, 64], sizes = [16, 64], strides = [1, 1]} : vector<16x128xf32> to vector<16x64xf32>
    %20 = arith.maximumf %18, %19 : vector<16x64xf32>
    %21 = vector.extract_strided_slice %20 {offsets = [0, 0], sizes = [16, 32], strides = [1, 1]} : vector<16x64xf32> to vector<16x32xf32>
    %22 = vector.extract_strided_slice %20 {offsets = [0, 32], sizes = [16, 32], strides = [1, 1]} : vector<16x64xf32> to vector<16x32xf32>
    %23 = arith.maximumf %21, %22 : vector<16x32xf32>
    %c0_8 = arith.constant 0 : index
    %c0_9 = arith.constant 0 : index
    %24 = vector.load %arg5[%c0_8, %c0_9] : memref<16x32xf32, #tpu.memory_space<vmem>>, vector<16x32xf32>
    tpu.vector_store %arg5[%c0_8, %c0_9], %23 {strides = array<i32>} : memref<16x32xf32, #tpu.memory_space<vmem>>, vector<16x32xf32>,
    return
  }
  func.func @transform_0(%arg0: i32) -> (i32, i32) {
    %c0_i32 = arith.constant 0 : i32
    %c0_i32_0 = arith.constant 0 : i32
    return %arg0, %c0_i32 : i32, i32
  }
  func.func @transform_1(%arg0: i32) -> (i32, i32) {
    %c0_i32 = arith.constant 0 : i32
    %c0_i32_0 = arith.constant 0 : i32
    %c0_i32_1 = arith.constant 0 : i32
    return %c0_i32, %c0_i32_0 : i32, i32
  }
  func.func @transform_2(%arg0: i32) -> (i32, i32) {
    %c0_i32 = arith.constant 0 : i32
    %c0_i32_0 = arith.constant 0 : i32
    %c0_i32_1 = arith.constant 0 : i32
    return %c0_i32, %c0_i32_0 : i32, i32
  }
  func.func @transform_3(%arg0: i32) -> (i32, i32) {
    %c0_i32 = arith.constant 0 : i32
    %c0_i32_0 = arith.constant 0 : i32
    return %arg0, %c0_i32 : i32, i32
  }
  func.func @transform_4(%arg0: i32) -> (i32, i32) {
    %c0_i32 = arith.constant 0 : i32
    %c0_i32_0 = arith.constant 0 : i32
    return %arg0, %c0_i32 : i32, i32
  }
}

</mosaic_0001>

<llo_original>
// kernel: tpu_custom_call.1
$region0: #{tpu_custom_call.1}
  #allocation0 [shape = 'u32[]', space=smem, size = 0x4, offset = 0x4, fixed_abs, tag = 'smem constant byte address 0x4 - core index']
  #allocation1 [shape = 'u32[144,128]{1,0:T(1,128)}', space=vmem, size = 0x12000, scoped, tag = 'internal scratch']
  %s0 = inlined_call_operand.hbm [shape: f32[64,320], index: 0, kind: input, shape index: {}]
  %s1 = inlined_call_operand.hbm [shape: f32[320,1024], index: 1, kind: input, shape index: {}]
  %s2 = inlined_call_operand.hbm [shape: f32[1,1024], index: 2, kind: input, shape index: {}]
  %s3 = inlined_call_operand.hbm [shape: f32[64,1024], index: 3, kind: output, shape index: {0}]
  %s4 = inlined_call_operand.vmem [shape: f32[64,32], index: 4, kind: output, shape index: {1}]
  %5 = xla_tuple %s3, %s4
  %s6 = sld [smem:[#allocation0]]
  $region65: #{tpu_custom_call.1} parent=0
    _
  %s8 = ssub.s32 1, %s6
  %s9 = scalar_select 0, %s8, %s6
  $region1: #{tpu_custom_call.1} parent=0
    #allocation2 [shape = 'u8[49152]{0}', space=vmem, size = 0xc000, scoped, tag = 'input window, operand 0']
    #allocation3 [shape = 's32[2]{0}', space=sflag, size = 0x8, scoped, tag = 'scoped memory for tpu_custom_call.1']
    #allocation4 [shape = 's32[2]{0}', space=sflag, size = 0x8, scoped, tag = 'scoped memory for tpu_custom_call.1']
    #allocation5 [shape = 'u8[1310720]{0}', space=vmem, size = 0x140000, scoped, tag = 'input window, operand 1, single buffered']
    #allocation6 [shape = 's32[1]{0}', space=sflag, size = 0x4, scoped, tag = 'scoped memory for tpu_custom_call.1']
    #allocation7 [shape = 'u8[4096]{0}', space=vmem, size = 0x1000, scoped, tag = 'input window, operand 2, single buffered']
    #allocation8 [shape = 'u8[131072]{0}', space=vmem, size = 0x20000, scoped, tag = 'output window, operand 0']
    %10 = vsyncpa [#allocation3], 0
    %s11 = scalar_lea.sflag [#allocation3], 1
    %12 = vsyncpa %s11, 0
    %13 = vsyncpa [#allocation6], 0
    %14 = vsyncpa [#allocation4], 0
    %s15 = scalar_lea.sflag [#allocation4], 1
    %16 = vsyncpa %s15, 0
    loop: start=0, step=1, limit=6
    $region2: #{tpu_custom_call.1} parent=1 // loop_pre_header
      _
    $region3: #{tpu_custom_call.1} parent=1 // loop_header
      %s18 = sphi 0, %s22
      %p19 = scmp.ge.s32.totalorder %s18, 6
      %s28 = sphi 0, %s30
      %s31 = sphi 0, %s28
      %s32 = sphi 0, %s31
      %s48 = sphi 0, %s32
      %s52 = sphi 0, %s52
      %s54 = sphi 0, %s52
      %s55 = sphi 0, %s54
      %s69 = sphi 0, %s55
      %s73 = sphi 0, %s73
      %s75 = sphi 0, %s73
      %s76 = sphi 0, %s75
      %s90 = sphi 0, %s76
      %s96 = sphi 0, %s98
      %s99 = sphi 0, %s96
      %s100 = sphi 0, %s99
      %s116 = sphi 0, %s100
      %s122 = sphi 0, %s124
      %s125 = sphi 0, %s122
      %s126 = sphi 0, %s125
      %s142 = sphi 0, %s126
    $region4: #{tpu_custom_call.1} parent=1 // loop_header_branch
      %21 = sbr.rel (%p19) target = $region8
    $region5: #{tpu_custom_call.1} parent=1 // loop_body
      %s23 = ssub.s32 %s18, 1
      %s24 = ssub.s32 %s18, 2
      %s25 = sadd.s32 %s18, 1
      %s26 = ssub.s32 %s18, %s25
      %p27 = scmp.eq.s32.totalorder %s26, 0
      %s29 = sadd.s32 %s28, 1
      %s30 = scalar_select %p27, %s28, %s29
      %p33 = pneg %p27
      %p34 = scmp.eq.s32.totalorder %s18, 3
      %p35 = por %p33, %p34
      %p36 = scmp.ne.s32.totalorder %s28, %s31
      %p37 = scmp.eq.s32.totalorder %s18, 0
      %p38 = por %p36, %p37
      %p39 = scmp.ne.s32.totalorder %s28, %s31
      %p40 = scmp.eq.s32.totalorder %s23, 3
      %p41 = por %p39, %p40
      %p42 = scmp.ne.s32.totalorder %s31, %s32
      %p43 = scmp.eq.s32.totalorder %s23, 0
      %p44 = por %p42, %p43
      %p45 = scmp.ne.s32.totalorder %s31, %s32
      %p46 = scmp.eq.s32.totalorder %s24, 3
      %p47 = por %p45, %p46
      %p49 = scmp.ne.s32.totalorder %s32, %s48
      %p50 = scmp.eq.s32.totalorder %s24, 0
      %p51 = por %p49, %p50
      %s53 = sadd.s32 %s52, 1
      %p56 = scmp.eq.s32.totalorder %s18, 3
      %p57 = scmp.ne.s32.totalorder %s52, %s54
      %p58 = scmp.eq.s32.totalorder %s18, 0
      %p59 = por %p57, %p58
      %p60 = scmp.ne.s32.totalorder %s52, %s54
      %p61 = scmp.eq.s32.totalorder %s23, 3
      %p62 = por %p60, %p61
      %p63 = scmp.ne.s32.totalorder %s54, %s55
      %p64 = scmp.eq.s32.totalorder %s23, 0
      %p65 = por %p63, %p64
      %p66 = scmp.ne.s32.totalorder %s54, %s55
      %p67 = scmp.eq.s32.totalorder %s24, 3
      %p68 = por %p66, %p67
      %p70 = scmp.ne.s32.totalorder %s55, %s69
      %p71 = scmp.eq.s32.totalorder %s24, 0
      %p72 = por %p70, %p71
      %s74 = sadd.s32 %s73, 1
      %p77 = scmp.eq.s32.totalorder %s18, 3
      %p78 = scmp.ne.s32.totalorder %s73, %s75
      %p79 = scmp.eq.s32.totalorder %s18, 0
      %p80 = por %p78, %p79
      %p81 = scmp.ne.s32.totalorder %s73, %s75
      %p82 = scmp.eq.s32.totalorder %s23, 3
      %p83 = por %p81, %p82
      %p84 = scmp.ne.s32.totalorder %s75, %s76
      %p85 = scmp.eq.s32.totalorder %s23, 0
      %p86 = por %p84, %p85
      %p87 = scmp.ne.s32.totalorder %s75, %s76
      %p88 = scmp.eq.s32.totalorder %s24, 3
      %p89 = por %p87, %p88
      %p91 = scmp.ne.s32.totalorder %s76, %s90
      %p92 = scmp.eq.s32.totalorder %s24, 0
      %p93 = por %p91, %p92
      %s94 = ssub.s32 %s18, %s25
      %p95 = scmp.eq.s32.totalorder %s94, 0
      %s97 = sadd.s32 %s96, 1
      %s98 = scalar_select %p95, %s96, %s97
      %p101 = pneg %p95
      %p102 = scmp.eq.s32.totalorder %s18, 3
      %p103 = por %p101, %p102
      %p104 = scmp.ne.s32.totalorder %s96, %s99
      %p105 = scmp.eq.s32.totalorder %s18, 0
      %p106 = por %p104, %p105
      %p107 = scmp.ne.s32.totalorder %s96, %s99
      %p108 = scmp.eq.s32.totalorder %s23, 3
      %p109 = por %p107, %p108
      %p110 = scmp.ne.s32.totalorder %s99, %s100
      %p111 = scmp.eq.s32.totalorder %s23, 0
      %p112 = por %p110, %p111
      %p113 = scmp.ne.s32.totalorder %s99, %s100
      %p114 = scmp.eq.s32.totalorder %s24, 3
      %p115 = por %p113, %p114
      %p117 = scmp.ne.s32.totalorder %s100, %s116
      %p118 = scmp.eq.s32.totalorder %s24, 0
      %p119 = por %p117, %p118
      %s120 = ssub.s32 %s18, %s25
      %p121 = scmp.eq.s32.totalorder %s120, 0
      %s123 = sadd.s32 %s122, 1
      %s124 = scalar_select %p121, %s122, %s123
      %p127 = pneg %p121
      %p128 = scmp.eq.s32.totalorder %s18, 3
      %p129 = por %p127, %p128
      %p130 = scmp.ne.s32.totalorder %s122, %s125
      %p131 = scmp.eq.s32.totalorder %s18, 0
      %p132 = por %p130, %p131
      %p133 = scmp.ne.s32.totalorder %s122, %s125
      %p134 = scmp.eq.s32.totalorder %s23, 3
      %p135 = por %p133, %p134
      %p136 = scmp.ne.s32.totalorder %s125, %s126
      %p137 = scmp.eq.s32.totalorder %s23, 0
      %p138 = por %p136, %p137
      %p139 = scmp.ne.s32.totalorder %s125, %s126
      %p140 = scmp.eq.s32.totalorder %s24, 3
      %p141 = por %p139, %p140
      %p143 = scmp.ne.s32.totalorder %s126, %s142
      %p144 = scmp.eq.s32.totalorder %s24, 0
      %p145 = por %p143, %p144
      %p146 = scmp.le.s32.totalorder 1, %s18
      %p147 = scmp.lt.s32.totalorder %s18, 5
      %p148 = pnand %p146, %p147
      %p149 = pneg %p148
      // Predicated region
      $region9: #{tpu_custom_call.1} parent=5 // pred_check
        _
      $region10: #{tpu_custom_call.1} parent=5 // pred_check_branch
        %151 = sbr.rel (%p148) target = $region12
      $region11: #{tpu_custom_call.1} parent=5 // pred_region
        %s152 = ssub.s32 %s18, 1
        // Predicated region
        $region13: #{tpu_custom_call.1} parent=11 // pred_check
          %p153 = pneg %p65
        $region14: #{tpu_custom_call.1} parent=11 // pred_check_branch
          %155 = sbr.rel (%p153) target = $region16
        $region15: #{tpu_custom_call.1} parent=11 // pred_region
          %s157 = ssub.s32 40960, 40960
          %158 = vsyncadd [#allocation6], %s157
          %s159 = sshll.u32 [#allocation5], 4
          %s160 = int_to_ptr.vmem [resolvable:$true] %s159
          %165 = dma.hbm_to_vmem [thread:$0]  %s1, 40960, %s160, [#allocation6], 1024, 1024, 64
        $region16: #{tpu_custom_call.1} parent=11 // pred_fallthru
          _
        // Predicated region
        $region17: #{tpu_custom_call.1} parent=11 // pred_check
          %p166 = pneg %p86
        $region18: #{tpu_custom_call.1} parent=11 // pred_check_branch
          %168 = sbr.rel (%p166) target = $region20
        $region19: #{tpu_custom_call.1} parent=11 // pred_region
          %s170 = ssub.s32 128, 128
          %171 = vsyncadd [#allocation6], %s170
          %s173 = sshll.u32 [#allocation7], 4
          %s174 = int_to_ptr.vmem [resolvable:$true] %s173
          %176 = dma.hbm_to_vmem [thread:$0]  %s2, 128, %s174, [#allocation6]
        $region20: #{tpu_custom_call.1} parent=11 // pred_fallthru
          _
      $region12: #{tpu_custom_call.1} parent=5 // pred_fallthru
        _
      %p177 = scmp.lt.s32.totalorder %s18, 4
      // Predicated region
      $region21: #{tpu_custom_call.1} parent=5 // pred_check
        %p178 = pneg %p177
      $region22: #{tpu_custom_call.1} parent=5 // pred_check_branch
        %180 = sbr.rel (%p178) target = $region24
      $region23: #{tpu_custom_call.1} parent=5 // pred_region
        // Predicated region
        $region25: #{tpu_custom_call.1} parent=23 // pred_check
          %p181 = pneg %p38
        $region26: #{tpu_custom_call.1} parent=23 // pred_check_branch
          %183 = sbr.rel (%p181) target = $region28
        $region27: #{tpu_custom_call.1} parent=23 // pred_region
          %s184 = sand.u32 %s28, 1
          %s185 = scalar_lea.sflag [#allocation3], %s184
          %s186 = sand.u32 %s28, 1
          %s187 = smul.addr %s186, 48
          %s188 = scalar_lea.vmem [#allocation2], %s187
          %s189 = smul.u32 2, %s18
          %s191 = ssub.s32 768, 768
          %192 = vsyncadd %s185, %s191
          %s193 = smul.addr %s189, 3
          %s194 = smul.addr %s193, 128
          %s195 = scalar_lea.hbm %s0, %s194
          %s196 = sshll.u32 %s188, 4
          %s197 = int_to_ptr.vmem [resolvable:$true] %s196
          %202 = dma.hbm_to_vmem [thread:$0]  %s195, 768, %s197, %s185, 384, 384, 24
        $region28: #{tpu_custom_call.1} parent=23 // pred_fallthru
          _
      $region24: #{tpu_custom_call.1} parent=5 // pred_fallthru
        _
      %p203 = scmp.le.s32.totalorder 1, %s18
      %p204 = scmp.lt.s32.totalorder %s18, 5
      %p205 = pnand %p203, %p204
      %p206 = pneg %p205
      // Predicated region
      $region29: #{tpu_custom_call.1} parent=5 // pred_check
        _
      $region30: #{tpu_custom_call.1} parent=5 // pred_check_branch
        %208 = sbr.rel (%p205) target = $region32
      $region31: #{tpu_custom_call.1} parent=5 // pred_region
        %s209 = ssub.s32 %s18, 1
        %s210 = sand.u32 %s31, 1
        %s211 = scalar_lea.sflag [#allocation3], %s210
        %s212 = sand.u32 %s31, 1
        %s213 = smul.addr %s212, 48
        %s214 = scalar_lea.vmem [#allocation2], %s213
        // Predicated region
        $region33: #{tpu_custom_call.1} parent=31 // pred_check
          %p215 = pneg %p44
        $region34: #{tpu_custom_call.1} parent=31 // pred_check_branch
          %217 = sbr.rel (%p215) target = $region36
        $region35: #{tpu_custom_call.1} parent=31 // pred_region
          %218 = dma.done %s211, 768
        $region36: #{tpu_custom_call.1} parent=31 // pred_fallthru
          _
        // Predicated region
        $region37: #{tpu_custom_call.1} parent=31 // pred_check
          %p219 = pneg %p65
        $region38: #{tpu_custom_call.1} parent=31 // pred_check_branch
          %221 = sbr.rel (%p219) target = $region40
        $region39: #{tpu_custom_call.1} parent=31 // pred_region
          %222 = dma.done [#allocation6], 40960
        $region40: #{tpu_custom_call.1} parent=31 // pred_fallthru
          _
        // Predicated region
        $region41: #{tpu_custom_call.1} parent=31 // pred_check
          %p223 = pneg %p86
        $region42: #{tpu_custom_call.1} parent=31 // pred_check_branch
          %225 = sbr.rel (%p223) target = $region44
        $region43: #{tpu_custom_call.1} parent=31 // pred_region
          %226 = dma.done [#allocation6], 128
        $region44: #{tpu_custom_call.1} parent=31 // pred_fallthru
          _
        %s227 = sand.u32 %s31, 1
        %s228 = scalar_lea.sflag [#allocation3], %s227
        %s229 = sand.u32 %s31, 1
        %s230 = smul.addr %s229, 48
        %s231 = scalar_lea.vmem [#allocation2], %s230
        %p232 = pneg %p44
        %p233 = pneg %p41
        %p234 = pneg %p65
        %p235 = pneg %p62
        %p236 = pneg %p86
        %p237 = pneg %p83
        %p238 = pneg %p112
        %p239 = pneg %p109
        %s240 = sand.u32 %s99, 1
        %s241 = scalar_lea.sflag [#allocation4], %s240
        %s242 = sand.u32 %s99, 1
        %s243 = smul.addr %s242, 128
        %s244 = scalar_lea.vmem [#allocation8], %s243
        %p245 = pneg %p138
        %p246 = pneg %p135
        %s247 = smul.u32 2, %s23
        %p248 = scmp.lt.s32.totalorder %s247, 7
        %s249 = scalar_select %p248, %s247, 7
        %s250 = smul.addr %s249, 8
        %s251 = scalar_lea.vmem %s4, %s250
        %s252 = smul.u32 2, %s23
        %s253 = smul.u32 2, %s23
        %s254 = smul.u32 2, %s23
        %p255 = scmp.lt.s32.totalorder %s254, 7
        %s256 = scalar_select %p255, %s254, 7
        %s257 = smul.addr %s256, 8
        %s258 = scalar_lea.vmem %s4, %s257
        %s259 = smul.u32 2, %s23
        %v260 = vld [vmem:[%s214] sm:$0xff]
        %v261 = vld [vmem:[%s214 + $0x8] sm:$0xff]
        %v262 = vld [vmem:[%s214 + $0x10] sm:$0xff]
        %v263 = vld [vmem:[%s214 + $0x18] sm:$0xff]
        %v264 = vld [vmem:[%s214 + $0x20] sm:$0xff]
        %v265 = vld [vmem:[%s214 + $0x28] sm:$0xff]
        %v266 = vld [vmem:[#allocation5] sm:$0xff]
        %v267 = vld [vmem:[#allocation5 + $0x8] sm:$0xff]
        %v268 = vld [vmem:[#allocation5 + $0x10] sm:$0xff]
        %v269 = vld [vmem:[#allocation5 + $0x18] sm:$0xff]
        %v270 = vld [vmem:[#allocation5 + $0x20] sm:$0xff]
        %v271 = vld [vmem:[#allocation5 + $0x28] sm:$0xff]
        %v272 = vld [vmem:[#allocation5 + $0x30] sm:$0xff]
        %v273 = vld [vmem:[#allocation5 + $0x38] sm:$0xff]
        %v274 = vld [vmem:[#allocation5 + $0x40] sm:$0xff]
        %v275 = vld [vmem:[#allocation5 + $0x48] sm:$0xff]
        %v276 = vld [vmem:[#allocation5 + $0x50] sm:$0xff]
        %v277 = vld [vmem:[#allocation5 + $0x58] sm:$0xff]
        %v278 = vld [vmem:[#allocation5 + $0x60] sm:$0xff]
        %v279 = vld [vmem:[#allocation5 + $0x68] sm:$0xff]
        %v280 = vld [vmem:[#allocation5 + $0x70] sm:$0xff]
        %v281 = vld [vmem:[#allocation5 + $0x78] sm:$0xff]
        %v282 = vld [vmem:[#allocation5 + $0x80] sm:$0xff]
        %v283 = vld [vmem:[#allocation5 + $0x88] sm:$0xff]
        %v284 = vld [vmem:[#allocation5 + $0x90] sm:$0xff]
        %v285 = vld [vmem:[#allocation5 + $0x98] sm:$0xff]
        %v286 = vld [vmem:[#allocation5 + $0xa0] sm:$0xff]
        %v287 = vld [vmem:[#allocation5 + $0xa8] sm:$0xff]
        %v288 = vld [vmem:[#allocation5 + $0xb0] sm:$0xff]
        %v289 = vld [vmem:[#allocation5 + $0xb8] sm:$0xff]
        %v290 = vld [vmem:[#allocation5 + $0xc0] sm:$0xff]
        %v291 = vld [vmem:[#allocation5 + $0xc8] sm:$0xff]
        %v292 = vld [vmem:[#allocation5 + $0xd0] sm:$0xff]
        %v293 = vld [vmem:[#allocation5 + $0xd8] sm:$0xff]
        %v294 = vld [vmem:[#allocation5 + $0xe0] sm:$0xff]
        %v295 = vld [vmem:[#allocation5 + $0xe8] sm:$0xff]
        %v296 = vld [vmem:[#allocation5 + $0xf0] sm:$0xff]
        %v297 = vld [vmem:[#allocation5 + $0xf8] sm:$0xff]
        %v298 = vld [vmem:[#allocation5 + $0x100] sm:$0xff]
        %v299 = vld [vmem:[#allocation5 + $0x108] sm:$0xff]
        %v300 = vld [vmem:[#allocation5 + $0x110] sm:$0xff]
        %v301 = vld [vmem:[#allocation5 + $0x118] sm:$0xff]
        %v302 = vld [vmem:[#allocation5 + $0x120] sm:$0xff]
        %v303 = vld [vmem:[#allocation5 + $0x128] sm:$0xff]
        %v304 = vld [vmem:[#allocation5 + $0x130] sm:$0xff]
        %v305 = vld [vmem:[#allocation5 + $0x138] sm:$0xff]
        %v306 = vld [vmem:[#allocation5 + $0x140] sm:$0xff]
        %v307 = vld [vmem:[#allocation5 + $0x148] sm:$0xff]
        %v308 = vld [vmem:[#allocation5 + $0x150] sm:$0xff]
        %v309 = vld [vmem:[#allocation5 + $0x158] sm:$0xff]
        %v310 = vld [vmem:[#allocation5 + $0x160] sm:$0xff]
        %v311 = vld [vmem:[#allocation5 + $0x168] sm:$0xff]
        %v312 = vld [vmem:[#allocation5 + $0x170] sm:$0xff]
        %v313 = vld [vmem:[#allocation5 + $0x178] sm:$0xff]
        %v314 = vld [vmem:[#allocation5 + $0x180] sm:$0xff]
        %v315 = vld [vmem:[#allocation5 + $0x188] sm:$0xff]
        %v316 = vld [vmem:[#allocation5 + $0x190] sm:$0xff]
        %v317 = vld [vmem:[#allocation5 + $0x198] sm:$0xff]
        %v318 = vld [vmem:[#allocation5 + $0x1a0] sm:$0xff]
        %v319 = vld [vmem:[#allocation5 + $0x1a8] sm:$0xff]
        %v320 = vld [vmem:[#allocation5 + $0x1b0] sm:$0xff]
        %v321 = vld [vmem:[#allocation5 + $0x1b8] sm:$0xff]
        %v322 = vld [vmem:[#allocation5 + $0x1c0] sm:$0xff]
        %v323 = vld [vmem:[#allocation5 + $0x1c8] sm:$0xff]
        %v324 = vld [vmem:[#allocation5 + $0x1d0] sm:$0xff]
        %v325 = vld [vmem:[#allocation5 + $0x1d8] sm:$0xff]
        %v326 = vld [vmem:[#allocation5 + $0x1e0] sm:$0xff]
        %v327 = vld [vmem:[#allocation5 + $0x1e8] sm:$0xff]
        %v328 = vld [vmem:[#allocation5 + $0x1f0] sm:$0xff]
        %v329 = vld [vmem:[#allocation5 + $0x1f8] sm:$0xff]
        %v330 = vld [vmem:[#allocation5 + $0x200] sm:$0xff]
        %v331 = vld [vmem:[#allocation5 + $0x208] sm:$0xff]
        %v332 = vld [vmem:[#allocation5 + $0x210] sm:$0xff]
        %v333 = vld [vmem:[#allocation5 + $0x218] sm:$0xff]
        %v334 = vld [vmem:[#allocation5 + $0x220] sm:$0xff]
        %v335 = vld [vmem:[#allocation5 + $0x228] sm:$0xff]
        %v336 = vld [vmem:[#allocation5 + $0x230] sm:$0xff]
        %v337 = vld [vmem:[#allocation5 + $0x238] sm:$0xff]
        %v338 = vld [vmem:[#allocation5 + $0x240] sm:$0xff]
        %v339 = vld [vmem:[#allocation5 + $0x248] sm:$0xff]
        %v340 = vld [vmem:[#allocation5 + $0x250] sm:$0xff]
        %v341 = vld [vmem:[#allocation5 + $0x258] sm:$0xff]
        %v342 = vld [vmem:[#allocation5 + $0x260] sm:$0xff]
        %v343 = vld [vmem:[#allocation5 + $0x268] sm:$0xff]
        %v344 = vld [vmem:[#allocation5 + $0x270] sm:$0xff]
        %v345 = vld [vmem:[#allocation5 + $0x278] sm:$0xff]
        %v346 = vld [vmem:[#allocation5 + $0x280] sm:$0xff]
        %v347 = vld [vmem:[#allocation5 + $0x288] sm:$0xff]
        %v348 = vld [vmem:[#allocation5 + $0x290] sm:$0xff]
        %v349 = vld [vmem:[#allocation5 + $0x298] sm:$0xff]
        %v350 = vld [vmem:[#allocation5 + $0x2a0] sm:$0xff]
        %v351 = vld [vmem:[#allocation5 + $0x2a8] sm:$0xff]
        %v352 = vld [vmem:[#allocation5 + $0x2b0] sm:$0xff]
        %v353 = vld [vmem:[#allocation5 + $0x2b8] sm:$0xff]
        %v354 = vld [vmem:[#allocation5 + $0x2c0] sm:$0xff]
        %v355 = vld [vmem:[#allocation5 + $0x2c8] sm:$0xff]
        %v356 = vld [vmem:[#allocation5 + $0x2d0] sm:$0xff]
        %v357 = vld [vmem:[#allocation5 + $0x2d8] sm:$0xff]
        %v358 = vld [vmem:[#allocation5 + $0x2e0] sm:$0xff]
        %v359 = vld [vmem:[#allocation5 + $0x2e8] sm:$0xff]
        %v360 = vld [vmem:[#allocation5 + $0x2f0] sm:$0xff]
        %v361 = vld [vmem:[#allocation5 + $0x2f8] sm:$0xff]
        %v362 = vld [vmem:[#allocation5 + $0x300] sm:$0xff]
        %v363 = vld [vmem:[#allocation5 + $0x308] sm:$0xff]
        %v364 = vld [vmem:[#allocation5 + $0x310] sm:$0xff]
        %v365 = vld [vmem:[#allocation5 + $0x318] sm:$0xff]
        %v366 = vld [vmem:[#allocation5 + $0x320] sm:$0xff]
        %v367 = vld [vmem:[#allocation5 + $0x328] sm:$0xff]
        %v368 = vld [vmem:[#allocation5 + $0x330] sm:$0xff]
        %v369 = vld [vmem:[#allocation5 + $0x338] sm:$0xff]
        %v370 = vld [vmem:[#allocation5 + $0x340] sm:$0xff]
        %v371 = vld [vmem:[#allocation5 + $0x348] sm:$0xff]
        %v372 = vld [vmem:[#allocation5 + $0x350] sm:$0xff]
        %v373 = vld [vmem:[#allocation5 + $0x358] sm:$0xff]
        %v374 = vld [vmem:[#allocation5 + $0x360] sm:$0xff]
        %v375 = vld [vmem:[#allocation5 + $0x368] sm:$0xff]
        %v376 = vld [vmem:[#allocation5 + $0x370] sm:$0xff]
        %v377 = vld [vmem:[#allocation5 + $0x378] sm:$0xff]
        %v378 = vld [vmem:[#allocation5 + $0x380] sm:$0xff]
        %v379 = vld [vmem:[#allocation5 + $0x388] sm:$0xff]
        %v380 = vld [vmem:[#allocation5 + $0x390] sm:$0xff]
        %v381 = vld [vmem:[#allocation5 + $0x398] sm:$0xff]
        %v382 = vld [vmem:[#allocation5 + $0x3a0] sm:$0xff]
        %v383 = vld [vmem:[#allocation5 + $0x3a8] sm:$0xff]
        %v384 = vld [vmem:[#allocation5 + $0x3b0] sm:$0xff]
        %v385 = vld [vmem:[#allocation5 + $0x3b8] sm:$0xff]
        %v386 = vld [vmem:[#allocation5 + $0x3c0] sm:$0xff]
        %v387 = vld [vmem:[#allocation5 + $0x3c8] sm:$0xff]
        %v388 = vld [vmem:[#allocation5 + $0x3d0] sm:$0xff]
        %v389 = vld [vmem:[#allocation5 + $0x3d8] sm:$0xff]
        %v390 = vld [vmem:[#allocation5 + $0x3e0] sm:$0xff]
        %v391 = vld [vmem:[#allocation5 + $0x3e8] sm:$0xff]
        %v392 = vld [vmem:[#allocation5 + $0x3f0] sm:$0xff]
        %v393 = vld [vmem:[#allocation5 + $0x3f8] sm:$0xff]
        %v394 = vld [vmem:[#allocation5 + $0x400] sm:$0xff]
        %v395 = vld [vmem:[#allocation5 + $0x408] sm:$0xff]
        %v396 = vld [vmem:[#allocation5 + $0x410] sm:$0xff]
        %v397 = vld [vmem:[#allocation5 + $0x418] sm:$0xff]
        %v398 = vld [vmem:[#allocation5 + $0x420] sm:$0xff]
        %v399 = vld [vmem:[#allocation5 + $0x428] sm:$0xff]
        %v400 = vld [vmem:[#allocation5 + $0x430] sm:$0xff]
        %v401 = vld [vmem:[#allocation5 + $0x438] sm:$0xff]
        %v402 = vld [vmem:[#allocation5 + $0x440] sm:$0xff]
        %v403 = vld [vmem:[#allocation5 + $0x448] sm:$0xff]
        %v404 = vld [vmem:[#allocation5 + $0x450] sm:$0xff]
        %v405 = vld [vmem:[#allocation5 + $0x458] sm:$0xff]
        %v406 = vld [vmem:[#allocation5 + $0x460] sm:$0xff]
        %v407 = vld [vmem:[#allocation5 + $0x468] sm:$0xff]
        %v408 = vld [vmem:[#allocation5 + $0x470] sm:$0xff]
        %v409 = vld [vmem:[#allocation5 + $0x478] sm:$0xff]
        %v410 = vld [vmem:[#allocation5 + $0x480] sm:$0xff]
        %v411 = vld [vmem:[#allocation5 + $0x488] sm:$0xff]
        %v412 = vld [vmem:[#allocation5 + $0x490] sm:$0xff]
        %v413 = vld [vmem:[#allocation5 + $0x498] sm:$0xff]
        %v414 = vld [vmem:[#allocation5 + $0x4a0] sm:$0xff]
        %v415 = vld [vmem:[#allocation5 + $0x4a8] sm:$0xff]
        %v416 = vld [vmem:[#allocation5 + $0x4b0] sm:$0xff]
        %v417 = vld [vmem:[#allocation5 + $0x4b8] sm:$0xff]
        %v418 = vld [vmem:[#allocation5 + $0x4c0] sm:$0xff]
        %v419 = vld [vmem:[#allocation5 + $0x4c8] sm:$0xff]
        %v420 = vld [vmem:[#allocation5 + $0x4d0] sm:$0xff]
        %v421 = vld [vmem:[#allocation5 + $0x4d8] sm:$0xff]
        %v422 = vld [vmem:[#allocation5 + $0x4e0] sm:$0xff]
        %v423 = vld [vmem:[#allocation5 + $0x4e8] sm:$0xff]
        %v424 = vld [vmem:[#allocation5 + $0x4f0] sm:$0xff]
        %v425 = vld [vmem:[#allocation5 + $0x4f8] sm:$0xff]
        %v426 = vld [vmem:[#allocation5 + $0x500] sm:$0xff]
        %v427 = vld [vmem:[#allocation5 + $0x508] sm:$0xff]
        %v428 = vld [vmem:[#allocation5 + $0x510] sm:$0xff]
        %v429 = vld [vmem:[#allocation5 + $0x518] sm:$0xff]
        %v430 = vld [vmem:[#allocation5 + $0x520] sm:$0xff]
        %v431 = vld [vmem:[#allocation5 + $0x528] sm:$0xff]
        %v432 = vld [vmem:[#allocation5 + $0x530] sm:$0xff]
        %v433 = vld [vmem:[#allocation5 + $0x538] sm:$0xff]
        %v434 = vld [vmem:[#allocation5 + $0x540] sm:$0xff]
        %v435 = vld [vmem:[#allocation5 + $0x548] sm:$0xff]
        %v436 = vld [vmem:[#allocation5 + $0x550] sm:$0xff]
        %v437 = vld [vmem:[#allocation5 + $0x558] sm:$0xff]
        %v438 = vld [vmem:[#allocation5 + $0x560] sm:$0xff]
        %v439 = vld [vmem:[#allocation5 + $0x568] sm:$0xff]
        %v440 = vld [vmem:[#allocation5 + $0x570] sm:$0xff]
        %v441 = vld [vmem:[#allocation5 + $0x578] sm:$0xff]
        %v442 = vld [vmem:[#allocation5 + $0x580] sm:$0xff]
        %v443 = vld [vmem:[#allocation5 + $0x588] sm:$0xff]
        %v444 = vld [vmem:[#allocation5 + $0x590] sm:$0xff]
        %v445 = vld [vmem:[#allocation5 + $0x598] sm:$0xff]
        %v446 = vld [vmem:[#allocation5 + $0x5a0] sm:$0xff]
        %v447 = vld [vmem:[#allocation5 + $0x5a8] sm:$0xff]
        %v448 = vld [vmem:[#allocation5 + $0x5b0] sm:$0xff]
        %v449 = vld [vmem:[#allocation5 + $0x5b8] sm:$0xff]
        %v450 = vld [vmem:[#allocation5 + $0x5c0] sm:$0xff]
        %v451 = vld [vmem:[#allocation5 + $0x5c8] sm:$0xff]
        %v452 = vld [vmem:[#allocation5 + $0x5d0] sm:$0xff]
        %v453 = vld [vmem:[#allocation5 + $0x5d8] sm:$0xff]
        %v454 = vld [vmem:[#allocation5 + $0x5e0] sm:$0xff]
        %v455 = vld [vmem:[#allocation5 + $0x5e8] sm:$0xff]
        %v456 = vld [vmem:[#allocation5 + $0x5f0] sm:$0xff]
        %v457 = vld [vmem:[#allocation5 + $0x5f8] sm:$0xff]
        %v458 = vld [vmem:[#allocation5 + $0x600] sm:$0xff]
        %v459 = vld [vmem:[#allocation5 + $0x608] sm:$0xff]
        %v460 = vld [vmem:[#allocation5 + $0x610] sm:$0xff]
        %v461 = vld [vmem:[#allocation5 + $0x618] sm:$0xff]
        %v462 = vld [vmem:[#allocation5 + $0x620] sm:$0xff]
        %v463 = vld [vmem:[#allocation5 + $0x628] sm:$0xff]
        %v464 = vld [vmem:[#allocation5 + $0x630] sm:$0xff]
        %v465 = vld [vmem:[#allocation5 + $0x638] sm:$0xff]
        %v466 = vld [vmem:[#allocation5 + $0x640] sm:$0xff]
        %v467 = vld [vmem:[#allocation5 + $0x648] sm:$0xff]
        %v468 = vld [vmem:[#allocation5 + $0x650] sm:$0xff]
        %v469 = vld [vmem:[#allocation5 + $0x658] sm:$0xff]
        %v470 = vld [vmem:[#allocation5 + $0x660] sm:$0xff]
        %v471 = vld [vmem:[#allocation5 + $0x668] sm:$0xff]
        %v472 = vld [vmem:[#allocation5 + $0x670] sm:$0xff]
        %v473 = vld [vmem:[#allocation5 + $0x678] sm:$0xff]
        %v474 = vld [vmem:[#allocation5 + $0x680] sm:$0xff]
        %v475 = vld [vmem:[#allocation5 + $0x688] sm:$0xff]
        %v476 = vld [vmem:[#allocation5 + $0x690] sm:$0xff]
        %v477 = vld [vmem:[#allocation5 + $0x698] sm:$0xff]
        %v478 = vld [vmem:[#allocation5 + $0x6a0] sm:$0xff]
        %v479 = vld [vmem:[#allocation5 + $0x6a8] sm:$0xff]
        %v480 = vld [vmem:[#allocation5 + $0x6b0] sm:$0xff]
        %v481 = vld [vmem:[#allocation5 + $0x6b8] sm:$0xff]
        %v482 = vld [vmem:[#allocation5 + $0x6c0] sm:$0xff]
        %v483 = vld [vmem:[#allocation5 + $0x6c8] sm:$0xff]
        %v484 = vld [vmem:[#allocation5 + $0x6d0] sm:$0xff]
        %v485 = vld [vmem:[#allocation5 + $0x6d8] sm:$0xff]
        %v486 = vld [vmem:[#allocation5 + $0x6e0] sm:$0xff]
        %v487 = vld [vmem:[#allocation5 + $0x6e8] sm:$0xff]
        %v488 = vld [vmem:[#allocation5 + $0x6f0] sm:$0xff]
        %v489 = vld [vmem:[#allocation5 + $0x6f8] sm:$0xff]
        %v490 = vld [vmem:[#allocation5 + $0x700] sm:$0xff]
        %v491 = vld [vmem:[#allocation5 + $0x708] sm:$0xff]
        %v492 = vld [vmem:[#allocation5 + $0x710] sm:$0xff]
        %v493 = vld [vmem:[#allocation5 + $0x718] sm:$0xff]
        %v494 = vld [vmem:[#allocation5 + $0x720] sm:$0xff]
        %v495 = vld [vmem:[#allocation5 + $0x728] sm:$0xff]
        %v496 = vld [vmem:[#allocation5 + $0x730] sm:$0xff]
        %v497 = vld [vmem:[#allocation5 + $0x738] sm:$0xff]
        %v498 = vld [vmem:[#allocation5 + $0x740] sm:$0xff]
        %v499 = vld [vmem:[#allocation5 + $0x748] sm:$0xff]
        %v500 = vld [vmem:[#allocation5 + $0x750] sm:$0xff]
        %v501 = vld [vmem:[#allocation5 + $0x758] sm:$0xff]
        %v502 = vld [vmem:[#allocation5 + $0x760] sm:$0xff]
        %v503 = vld [vmem:[#allocation5 + $0x768] sm:$0xff]
        %v504 = vld [vmem:[#allocation5 + $0x770] sm:$0xff]
        %v505 = vld [vmem:[#allocation5 + $0x778] sm:$0xff]
        %v506 = vld [vmem:[#allocation5 + $0x780] sm:$0xff]
        %v507 = vld [vmem:[#allocation5 + $0x788] sm:$0xff]
        %v508 = vld [vmem:[#allocation5 + $0x790] sm:$0xff]
        %v509 = vld [vmem:[#allocation5 + $0x798] sm:$0xff]
        %v510 = vld [vmem:[#allocation5 + $0x7a0] sm:$0xff]
        %v511 = vld [vmem:[#allocation5 + $0x7a8] sm:$0xff]
        %v512 = vld [vmem:[#allocation5 + $0x7b0] sm:$0xff]
        %v513 = vld [vmem:[#allocation5 + $0x7b8] sm:$0xff]
        %v514 = vld [vmem:[#allocation5 + $0x7c0] sm:$0xff]
        %v515 = vld [vmem:[#allocation5 + $0x7c8] sm:$0xff]
        %v516 = vld [vmem:[#allocation5 + $0x7d0] sm:$0xff]
        %v517 = vld [vmem:[#allocation5 + $0x7d8] sm:$0xff]
        %v518 = vld [vmem:[#allocation5 + $0x7e0] sm:$0xff]
        %v519 = vld [vmem:[#allocation5 + $0x7e8] sm:$0xff]
        %v520 = vld [vmem:[#allocation5 + $0x7f0] sm:$0xff]
        %v521 = vld [vmem:[#allocation5 + $0x7f8] sm:$0xff]
        %v522 = vld [vmem:[#allocation5 + $0x800] sm:$0xff]
        %v523 = vld [vmem:[#allocation5 + $0x808] sm:$0xff]
        %v524 = vld [vmem:[#allocation5 + $0x810] sm:$0xff]
        %v525 = vld [vmem:[#allocation5 + $0x818] sm:$0xff]
        %v526 = vld [vmem:[#allocation5 + $0x820] sm:$0xff]
        %v527 = vld [vmem:[#allocation5 + $0x828] sm:$0xff]
        %v528 = vld [vmem:[#allocation5 + $0x830] sm:$0xff]
        %v529 = vld [vmem:[#allocation5 + $0x838] sm:$0xff]
        %v530 = vld [vmem:[#allocation5 + $0x840] sm:$0xff]
        %v531 = vld [vmem:[#allocation5 + $0x848] sm:$0xff]
        %v532 = vld [vmem:[#allocation5 + $0x850] sm:$0xff]
        %v533 = vld [vmem:[#allocation5 + $0x858] sm:$0xff]
        %v534 = vld [vmem:[#allocation5 + $0x860] sm:$0xff]
        %v535 = vld [vmem:[#allocation5 + $0x868] sm:$0xff]
        %v536 = vld [vmem:[#allocation5 + $0x870] sm:$0xff]
        %v537 = vld [vmem:[#allocation5 + $0x878] sm:$0xff]
        %v538 = vld [vmem:[#allocation5 + $0x880] sm:$0xff]
        %v539 = vld [vmem:[#allocation5 + $0x888] sm:$0xff]
        %v540 = vld [vmem:[#allocation5 + $0x890] sm:$0xff]
        %v541 = vld [vmem:[#allocation5 + $0x898] sm:$0xff]
        %v542 = vld [vmem:[#allocation5 + $0x8a0] sm:$0xff]
        %v543 = vld [vmem:[#allocation5 + $0x8a8] sm:$0xff]
        %v544 = vld [vmem:[#allocation5 + $0x8b0] sm:$0xff]
        %v545 = vld [vmem:[#allocation5 + $0x8b8] sm:$0xff]
        %v546 = vld [vmem:[#allocation5 + $0x8c0] sm:$0xff]
        %v547 = vld [vmem:[#allocation5 + $0x8c8] sm:$0xff]
        %v548 = vld [vmem:[#allocation5 + $0x8d0] sm:$0xff]
        %v549 = vld [vmem:[#allocation5 + $0x8d8] sm:$0xff]
        %v550 = vld [vmem:[#allocation5 + $0x8e0] sm:$0xff]
        %v551 = vld [vmem:[#allocation5 + $0x8e8] sm:$0xff]
        %v552 = vld [vmem:[#allocation5 + $0x8f0] sm:$0xff]
        %v553 = vld [vmem:[#allocation5 + $0x8f8] sm:$0xff]
        %v554 = vld [vmem:[#allocation5 + $0x900] sm:$0xff]
        %v555 = vld [vmem:[#allocation5 + $0x908] sm:$0xff]
        %v556 = vld [vmem:[#allocation5 + $0x910] sm:$0xff]
        %v557 = vld [vmem:[#allocation5 + $0x918] sm:$0xff]
        %v558 = vld [vmem:[#allocation5 + $0x920] sm:$0xff]
        %v559 = vld [vmem:[#allocation5 + $0x928] sm:$0xff]
        %v560 = vld [vmem:[#allocation5 + $0x930] sm:$0xff]
        %v561 = vld [vmem:[#allocation5 + $0x938] sm:$0xff]
        %v562 = vld [vmem:[#allocation5 + $0x940] sm:$0xff]
        %v563 = vld [vmem:[#allocation5 + $0x948] sm:$0xff]
        %v564 = vld [vmem:[#allocation5 + $0x950] sm:$0xff]
        %v565 = vld [vmem:[#allocation5 + $0x958] sm:$0xff]
        %v566 = vld [vmem:[#allocation5 + $0x960] sm:$0xff]
        %v567 = vld [vmem:[#allocation5 + $0x968] sm:$0xff]
        %v568 = vld [vmem:[#allocation5 + $0x970] sm:$0xff]
        %v569 = vld [vmem:[#allocation5 + $0x978] sm:$0xff]
        %v570 = vld [vmem:[#allocation5 + $0x980] sm:$0xff]
        %v571 = vld [vmem:[#allocation5 + $0x988] sm:$0xff]
        %v572 = vld [vmem:[#allocation5 + $0x990] sm:$0xff]
        %v573 = vld [vmem:[#allocation5 + $0x998] sm:$0xff]
        %v574 = vld [vmem:[#allocation5 + $0x9a0] sm:$0xff]
        %v575 = vld [vmem:[#allocation5 + $0x9a8] sm:$0xff]
        %v576 = vld [vmem:[#allocation5 + $0x9b0] sm:$0xff]
        %v577 = vld [vmem:[#allocation5 + $0x9b8] sm:$0xff]
        %v578 = vld [vmem:[#allocation5 + $0x9c0] sm:$0xff]
        %v579 = vld [vmem:[#allocation5 + $0x9c8] sm:$0xff]
        %v580 = vld [vmem:[#allocation5 + $0x9d0] sm:$0xff]
        %v581 = vld [vmem:[#allocation5 + $0x9d8] sm:$0xff]
        %v582 = vld [vmem:[#allocation5 + $0x9e0] sm:$0xff]
        %v583 = vld [vmem:[#allocation5 + $0x9e8] sm:$0xff]
        %v584 = vld [vmem:[#allocation5 + $0x9f0] sm:$0xff]
        %v585 = vld [vmem:[#allocation5 + $0x9f8] sm:$0xff]
        %v586 = vld [vmem:[#allocation7] sm:$0xff]
        %v588 = vlaneseq
        %v589 = vshrl.u32 %v588, 7
        %v590 = vsub.s32 0, %v589
        %v591 = vrot.slane %v586, %v590
        %v592 = vlaneseq
        %v593 = vshrl.u32 %v592, 7
        %v594 = vsub.s32 1, %v593
        %v595 = vrot.slane %v586, %v594
        %v596 = vlaneseq
        %v597 = vshrl.u32 %v596, 7
        %v598 = vsub.s32 2, %v597
        %v599 = vrot.slane %v586, %v598
        %v600 = vlaneseq
        %v601 = vshrl.u32 %v600, 7
        %v602 = vsub.s32 3, %v601
        %v603 = vrot.slane %v586, %v602
        %v604 = vlaneseq
        %v605 = vshrl.u32 %v604, 7
        %v606 = vsub.s32 4, %v605
        %v607 = vrot.slane %v586, %v606
        %v608 = vlaneseq
        %v609 = vshrl.u32 %v608, 7
        %v610 = vsub.s32 5, %v609
        %v611 = vrot.slane %v586, %v610
        %v612 = vlaneseq
        %v613 = vshrl.u32 %v612, 7
        %v614 = vsub.s32 6, %v613
        %v615 = vrot.slane %v586, %v614
        %v616 = vlaneseq
        %v617 = vshrl.u32 %v616, 7
        %v618 = vsub.s32 7, %v617
        %v619 = vrot.slane %v586, %v618
        %vm628 = vcmask 523264
        %v630 = vsel %vm628, %v262, 0
        %v633 = vsel %vm628, %v265, 0
        %635 = vmatprep.subr.mxu0 %v267
        %636 = vmatpush1.msra.mxu0 %v266
        %637 = vmatprep.subr.mxu0 %v275
        %638 = vmatpush1.msra.mxu0 %v274
        %639 = vmatprep.subr.mxu0 %v283
        %640 = vmatpush1.msra.mxu0 %v282
        %641 = vmatprep.subr.mxu0 %v291
        %642 = vmatpush1.msra.mxu0 %v290
        %643 = vmatprep.subr.mxu0 %v299
        %644 = vmatpush1.msra.mxu0 %v298
        %645 = vmatprep.subr.mxu0 %v307
        %646 = vmatpush1.msra.mxu0 %v306
        %647 = vmatprep.subr.mxu0 %v315
        %648 = vmatpush1.msra.mxu0 %v314
        %649 = vmatprep.subr.mxu0 %v323
        %650 = vmatpush1.msra.mxu0 %v322
        %651 = vmatprep.subr.mxu0 %v331
        %652 = vmatpush1.msra.mxu0 %v330
        %653 = vmatprep.subr.mxu0 %v339
        %654 = vmatpush1.msra.mxu0 %v338
        %655 = vmatprep.subr.mxu0 %v347
        %656 = vmatpush1.msra.mxu0 %v346
        %657 = vmatprep.subr.mxu0 %v355
        %658 = vmatpush1.msra.mxu0 %v354
        %659 = vmatprep.subr.mxu0 %v363
        %660 = vmatpush1.msra.mxu0 %v362
        %661 = vmatprep.subr.mxu0 %v371
        %662 = vmatpush1.msra.mxu0 %v370
        %663 = vmatprep.subr.mxu0 %v379
        %664 = vmatpush1.msra.mxu0 %v378
        %665 = vmatprep.subr.mxu0 %v387
        %666 = vmatpush1.msra.mxu0 %v386
        %667 = vmatprep.subr.mxu0 %v395
        %668 = vmatpush1.msra.mxu0 %v394
        %669 = vmatprep.subr.mxu0 %v403
        %670 = vmatpush1.msra.mxu0 %v402
        %671 = vmatprep.subr.mxu0 %v411
        %672 = vmatpush1.msra.mxu0 %v410
        %673 = vmatprep.subr.mxu0 %v419
        %674 = vmatpush1.msra.mxu0 %v418
        %675 = vmatprep.subr.mxu0 %v427
        %676 = vmatpush1.msra.mxu0 %v426
        %677 = vmatprep.subr.mxu0 %v435
        %678 = vmatpush1.msra.mxu0 %v434
        %679 = vmatprep.subr.mxu0 %v443
        %680 = vmatpush1.msra.mxu0 %v442
        %681 = vmatprep.subr.mxu0 %v451
        %682 = vmatpush1.msra.mxu0 %v450
        %683 = vmatprep.subr.mxu0 %v459
        %684 = vmatpush1.msra.mxu0 %v458
        %685 = vmatprep.subr.mxu0 %v467
        %686 = vmatpush1.msra.mxu0 %v466
        %687 = vmatprep.subr.mxu0 %v475
        %688 = vmatpush1.msra.mxu0 %v474
        %689 = vmatprep.subr.mxu0 %v483
        %690 = vmatpush1.msra.mxu0 %v482
        %691 = vmatprep.subr.mxu0 %v491
        %692 = vmatpush1.msra.mxu0 %v490
        %693 = vmatprep.subr.mxu0 %v499
        %694 = vmatpush1.msra.mxu0 %v498
        %695 = vmatprep.subr.mxu0 %v507
        %696 = vmatpush1.msra.mxu0 %v506
        %697 = vmatprep.subr.mxu0 %v515
        %698 = vmatpush1.msra.mxu0 %v514
        %699 = vmatprep.mubr.f32.mxu0 %v261
        %700 = vmatmul.mubr.f32.gmra.mrb[0].mxu0 %v260
        %v701 = vpop.f32.mrb[0].mxu0
        %v702 = vadd.f32 %v591, %v701
        %v703 = vpop.f32.mrb[0].mxu0
        %v704 = vadd.f32 %v595, %v703
        %705 = vmatprep.mubr.f32.mxu0 %v264
        %706 = vmatmul.mubr.f32.gmra.mrb[0].mxu0 %v263
        %v707 = vpop.f32.mrb[0].mxu0
        %v708 = vadd.f32 %v591, %v707
        %v709 = vpop.f32.mrb[0].mxu0
        %v710 = vadd.f32 %v595, %v709
        %711 = vdwg.mxu0
        %712 = vmatprep.subr.mxu0 %v523
        %713 = vmatpush1.msra.mxu0 %v522
        %714 = vmatprep.subr.mxu0 %v531
        %715 = vmatpush1.msra.mxu0 %v530
        %716 = vmatprep.subr.mxu0 %v539
        %717 = vmatpush1.msra.mxu0 %v538
        %718 = vmatprep.subr.mxu0 %v547
        %719 = vmatpush1.msra.mxu0 %v546
        %720 = vmatprep.subr.mxu0 %v555
        %721 = vmatpush1.msra.mxu0 %v554
        %722 = vmatprep.subr.mxu0 %v563
        %723 = vmatpush1.msra.mxu0 %v562
        %724 = vmatprep.subr.mxu0 %v571
        %725 = vmatpush1.msra.mxu0 %v570
        %726 = vmatprep.subr.mxu0 %v579
        %727 = vmatpush1.msra.mxu0 %v578
        %728 = vmatprep.subr.mxu0 0.0
        %729 = vmatpush1.msra.mxu0 0.0
        %730 = vmatprep.subr.mxu0 0.0
        %731 = vmatpush1.msra.mxu0 0.0
        %732 = vmatprep.subr.mxu0 0.0
        %733 = vmatpush1.msra.mxu0 0.0
        %734 = vmatprep.subr.mxu0 0.0
        %735 = vmatpush1.msra.mxu0 0.0
        %736 = vmatprep.subr.mxu0 0.0
        %737 = vmatpush1.msra.mxu0 0.0
        %738 = vmatprep.subr.mxu0 0.0
        %739 = vmatpush1.msra.mxu0 0.0
        %740 = vmatprep.subr.mxu0 0.0
        %741 = vmatpush1.msra.mxu0 0.0
        %742 = vmatprep.subr.mxu0 0.0
        %743 = vmatpush1.msra.mxu0 0.0
        %744 = vmatprep.subr.mxu0 0.0
        %745 = vmatpush1.msra.mxu0 0.0
        %746 = vmatprep.subr.mxu0 0.0
        %747 = vmatpush1.msra.mxu0 0.0
        %748 = vmatprep.subr.mxu0 0.0
        %749 = vmatpush1.msra.mxu0 0.0
        %750 = vmatprep.subr.mxu0 0.0
        %751 = vmatpush1.msra.mxu0 0.0
        %752 = vmatprep.subr.mxu0 0.0
        %753 = vmatpush1.msra.mxu0 0.0
        %754 = vmatprep.subr.mxu0 0.0
        %755 = vmatpush1.msra.mxu0 0.0
        %756 = vmatprep.subr.mxu0 0.0
        %757 = vmatpush1.msra.mxu0 0.0
        %758 = vmatprep.subr.mxu0 0.0
        %759 = vmatpush1.msra.mxu0 0.0
        %760 = vmatprep.subr.mxu0 0.0
        %761 = vmatpush1.msra.mxu0 0.0
        %762 = vmatprep.subr.mxu0 0.0
        %763 = vmatpush1.msra.mxu0 0.0
        %764 = vmatprep.subr.mxu0 0.0
        %765 = vmatpush1.msra.mxu0 0.0
        %766 = vmatprep.subr.mxu0 0.0
        %767 = vmatpush1.msra.mxu0 0.0
        %768 = vmatprep.subr.mxu0 0.0
        %769 = vmatpush1.msra.mxu0 0.0
        %770 = vmatprep.subr.mxu0 0.0
        %771 = vmatpush1.msra.mxu0 0.0
        %772 = vmatprep.subr.mxu0 0.0
        %773 = vmatpush1.msra.mxu0 0.0
        %774 = vmatprep.subr.mxu0 0.0
        %775 = vmatpush1.msra.mxu0 0.0
        %776 = vmatprep.mubr.f32.mxu0 0.0
        %777 = vmatmul.mubr.f32.gmra.mrb[0].mxu0 %v630
        %v778 = vpop.f32.mrb[0].mxu0
        %v779 = vadd.f32 %v702, %v778
        %v780 = vpop.f32.mrb[0].mxu0
        %v781 = vadd.f32 %v704, %v780
        %782 = vmatprep.mubr.f32.mxu0 0.0
        %783 = vmatmul.mubr.f32.gmra.mrb[0].mxu0 %v633
        %v784 = vpop.f32.mrb[0].mxu0
        %v785 = vadd.f32 %v708, %v784
        %v786 = vpop.f32.mrb[0].mxu0
        %v787 = vadd.f32 %v710, %v786
        %788 = vdwg.mxu0
        %789 = vmatprep.subr.mxu0 %v269
        %790 = vmatpush1.msra.mxu0 %v268
        %791 = vmatprep.subr.mxu0 %v277
        %792 = vmatpush1.msra.mxu0 %v276
        %793 = vmatprep.subr.mxu0 %v285
        %794 = vmatpush1.msra.mxu0 %v284
        %795 = vmatprep.subr.mxu0 %v293
        %796 = vmatpush1.msra.mxu0 %v292
        %797 = vmatprep.subr.mxu0 %v301
        %798 = vmatpush1.msra.mxu0 %v300
        %799 = vmatprep.subr.mxu0 %v309
        %800 = vmatpush1.msra.mxu0 %v308
        %801 = vmatprep.subr.mxu0 %v317
        %802 = vmatpush1.msra.mxu0 %v316
        %803 = vmatprep.subr.mxu0 %v325
        %804 = vmatpush1.msra.mxu0 %v324
        %805 = vmatprep.subr.mxu0 %v333
        %806 = vmatpush1.msra.mxu0 %v332
        %807 = vmatprep.subr.mxu0 %v341
        %808 = vmatpush1.msra.mxu0 %v340
        %809 = vmatprep.subr.mxu0 %v349
        %810 = vmatpush1.msra.mxu0 %v348
        %811 = vmatprep.subr.mxu0 %v357
        %812 = vmatpush1.msra.mxu0 %v356
        %813 = vmatprep.subr.mxu0 %v365
        %814 = vmatpush1.msra.mxu0 %v364
        %815 = vmatprep.subr.mxu0 %v373
        %816 = vmatpush1.msra.mxu0 %v372
        %817 = vmatprep.subr.mxu0 %v381
        %818 = vmatpush1.msra.mxu0 %v380
        %819 = vmatprep.subr.mxu0 %v389
        %820 = vmatpush1.msra.mxu0 %v388
        %821 = vmatprep.subr.mxu0 %v397
        %822 = vmatpush1.msra.mxu0 %v396
        %823 = vmatprep.subr.mxu0 %v405
        %824 = vmatpush1.msra.mxu0 %v404
        %825 = vmatprep.subr.mxu0 %v413
        %826 = vmatpush1.msra.mxu0 %v412
        %827 = vmatprep.subr.mxu0 %v421
        %828 = vmatpush1.msra.mxu0 %v420
        %829 = vmatprep.subr.mxu0 %v429
        %830 = vmatpush1.msra.mxu0 %v428
        %831 = vmatprep.subr.mxu0 %v437
        %832 = vmatpush1.msra.mxu0 %v436
        %833 = vmatprep.subr.mxu0 %v445
        %834 = vmatpush1.msra.mxu0 %v444
        %835 = vmatprep.subr.mxu0 %v453
        %836 = vmatpush1.msra.mxu0 %v452
        %837 = vmatprep.subr.mxu0 %v461
        %838 = vmatpush1.msra.mxu0 %v460
        %839 = vmatprep.subr.mxu0 %v469
        %840 = vmatpush1.msra.mxu0 %v468
        %841 = vmatprep.subr.mxu0 %v477
        %842 = vmatpush1.msra.mxu0 %v476
        %843 = vmatprep.subr.mxu0 %v485
        %844 = vmatpush1.msra.mxu0 %v484
        %845 = vmatprep.subr.mxu0 %v493
        %846 = vmatpush1.msra.mxu0 %v492
        %847 = vmatprep.subr.mxu0 %v501
        %848 = vmatpush1.msra.mxu0 %v500
        %849 = vmatprep.subr.mxu0 %v509
        %850 = vmatpush1.msra.mxu0 %v508
        %851 = vmatprep.subr.mxu0 %v517
        %852 = vmatpush1.msra.mxu0 %v516
        %853 = vmatprep.mubr.f32.mxu0 %v261
        %854 = vmatmul.mubr.f32.gmra.mrb[0].mxu0 %v260
        %v855 = vpop.f32.mrb[0].mxu0
        %v856 = vadd.f32 %v599, %v855
        %v857 = vpop.f32.mrb[0].mxu0
        %v858 = vadd.f32 %v603, %v857
        %859 = vmatprep.mubr.f32.mxu0 %v264
        %860 = vmatmul.mubr.f32.gmra.mrb[0].mxu0 %v263
        %v861 = vpop.f32.mrb[0].mxu0
        %v862 = vadd.f32 %v599, %v861
        %v863 = vpop.f32.mrb[0].mxu0
        %v864 = vadd.f32 %v603, %v863
        %865 = vdwg.mxu0
        %866 = vmatprep.subr.mxu0 %v525
        %867 = vmatpush1.msra.mxu0 %v524
        %868 = vmatprep.subr.mxu0 %v533
        %869 = vmatpush1.msra.mxu0 %v532
        %870 = vmatprep.subr.mxu0 %v541
        %871 = vmatpush1.msra.mxu0 %v540
        %872 = vmatprep.subr.mxu0 %v549
        %873 = vmatpush1.msra.mxu0 %v548
        %874 = vmatprep.subr.mxu0 %v557
        %875 = vmatpush1.msra.mxu0 %v556
        %876 = vmatprep.subr.mxu0 %v565
        %877 = vmatpush1.msra.mxu0 %v564
        %878 = vmatprep.subr.mxu0 %v573
        %879 = vmatpush1.msra.mxu0 %v572
        %880 = vmatprep.subr.mxu0 %v581
        %881 = vmatpush1.msra.mxu0 %v580
        %882 = vmatprep.subr.mxu0 0.0
        %883 = vmatpush1.msra.mxu0 0.0
        %884 = vmatprep.subr.mxu0 0.0
        %885 = vmatpush1.msra.mxu0 0.0
        %886 = vmatprep.subr.mxu0 0.0
        %887 = vmatpush1.msra.mxu0 0.0
        %888 = vmatprep.subr.mxu0 0.0
        %889 = vmatpush1.msra.mxu0 0.0
        %890 = vmatprep.subr.mxu0 0.0
        %891 = vmatpush1.msra.mxu0 0.0
        %892 = vmatprep.subr.mxu0 0.0
        %893 = vmatpush1.msra.mxu0 0.0
        %894 = vmatprep.subr.mxu0 0.0
        %895 = vmatpush1.msra.mxu0 0.0
        %896 = vmatprep.subr.mxu0 0.0
        %897 = vmatpush1.msra.mxu0 0.0
        %898 = vmatprep.subr.mxu0 0.0
        %899 = vmatpush1.msra.mxu0 0.0
        %900 = vmatprep.subr.mxu0 0.0
        %901 = vmatpush1.msra.mxu0 0.0
        %902 = vmatprep.subr.mxu0 0.0
        %903 = vmatpush1.msra.mxu0 0.0
        %904 = vmatprep.subr.mxu0 0.0
        %905 = vmatpush1.msra.mxu0 0.0
        %906 = vmatprep.subr.mxu0 0.0
        %907 = vmatpush1.msra.mxu0 0.0
        %908 = vmatprep.subr.mxu0 0.0
        %909 = vmatpush1.msra.mxu0 0.0
        %910 = vmatprep.subr.mxu0 0.0
        %911 = vmatpush1.msra.mxu0 0.0
        %912 = vmatprep.subr.mxu0 0.0
        %913 = vmatpush1.msra.mxu0 0.0
        %914 = vmatprep.subr.mxu0 0.0
        %915 = vmatpush1.msra.mxu0 0.0
        %916 = vmatprep.subr.mxu0 0.0
        %917 = vmatpush1.msra.mxu0 0.0
        %918 = vmatprep.subr.mxu0 0.0
        %919 = vmatpush1.msra.mxu0 0.0
        %920 = vmatprep.subr.mxu0 0.0
        %921 = vmatpush1.msra.mxu0 0.0
        %922 = vmatprep.subr.mxu0 0.0
        %923 = vmatpush1.msra.mxu0 0.0
        %924 = vmatprep.subr.mxu0 0.0
        %925 = vmatpush1.msra.mxu0 0.0
        %926 = vmatprep.subr.mxu0 0.0
        %927 = vmatpush1.msra.mxu0 0.0
        %928 = vmatprep.subr.mxu0 0.0
        %929 = vmatpush1.msra.mxu0 0.0
        %930 = vmatprep.mubr.f32.mxu0 0.0
        %931 = vmatmul.mubr.f32.gmra.mrb[0].mxu0 %v630
        %v932 = vpop.f32.mrb[0].mxu0
        %v933 = vadd.f32 %v856, %v932
        %v934 = vpop.f32.mrb[0].mxu0
        %v935 = vadd.f32 %v858, %v934
        %936 = vmatprep.mubr.f32.mxu0 0.0
        %937 = vmatmul.mubr.f32.gmra.mrb[0].mxu0 %v633
        %v938 = vpop.f32.mrb[0].mxu0
        %v939 = vadd.f32 %v862, %v938
        %v940 = vpop.f32.mrb[0].mxu0
        %v941 = vadd.f32 %v864, %v940
        %942 = vdwg.mxu0
        %943 = vmatprep.subr.mxu0 %v271
        %944 = vmatpush1.msra.mxu0 %v270
        %945 = vmatprep.subr.mxu0 %v279
        %946 = vmatpush1.msra.mxu0 %v278
        %947 = vmatprep.subr.mxu0 %v287
        %948 = vmatpush1.msra.mxu0 %v286
        %949 = vmatprep.subr.mxu0 %v295
        %950 = vmatpush1.msra.mxu0 %v294
        %951 = vmatprep.subr.mxu0 %v303
        %952 = vmatpush1.msra.mxu0 %v302
        %953 = vmatprep.subr.mxu0 %v311
        %954 = vmatpush1.msra.mxu0 %v310
        %955 = vmatprep.subr.mxu0 %v319
        %956 = vmatpush1.msra.mxu0 %v318
        %957 = vmatprep.subr.mxu0 %v327
        %958 = vmatpush1.msra.mxu0 %v326
        %959 = vmatprep.subr.mxu0 %v335
        %960 = vmatpush1.msra.mxu0 %v334
        %961 = vmatprep.subr.mxu0 %v343
        %962 = vmatpush1.msra.mxu0 %v342
        %963 = vmatprep.subr.mxu0 %v351
        %964 = vmatpush1.msra.mxu0 %v350
        %965 = vmatprep.subr.mxu0 %v359
        %966 = vmatpush1.msra.mxu0 %v358
        %967 = vmatprep.subr.mxu0 %v367
        %968 = vmatpush1.msra.mxu0 %v366
        %969 = vmatprep.subr.mxu0 %v375
        %970 = vmatpush1.msra.mxu0 %v374
        %971 = vmatprep.subr.mxu0 %v383
        %972 = vmatpush1.msra.mxu0 %v382
        %973 = vmatprep.subr.mxu0 %v391
        %974 = vmatpush1.msra.mxu0 %v390
        %975 = vmatprep.subr.mxu0 %v399
        %976 = vmatpush1.msra.mxu0 %v398
        %977 = vmatprep.subr.mxu0 %v407
        %978 = vmatpush1.msra.mxu0 %v406
        %979 = vmatprep.subr.mxu0 %v415
        %980 = vmatpush1.msra.mxu0 %v414
        %981 = vmatprep.subr.mxu0 %v423
        %982 = vmatpush1.msra.mxu0 %v422
        %983 = vmatprep.subr.mxu0 %v431
        %984 = vmatpush1.msra.mxu0 %v430
        %985 = vmatprep.subr.mxu0 %v439
        %986 = vmatpush1.msra.mxu0 %v438
        %987 = vmatprep.subr.mxu0 %v447
        %988 = vmatpush1.msra.mxu0 %v446
        %989 = vmatprep.subr.mxu0 %v455
        %990 = vmatpush1.msra.mxu0 %v454
        %991 = vmatprep.subr.mxu0 %v463
        %992 = vmatpush1.msra.mxu0 %v462
        %993 = vmatprep.subr.mxu0 %v471
        %994 = vmatpush1.msra.mxu0 %v470
        %995 = vmatprep.subr.mxu0 %v479
        %996 = vmatpush1.msra.mxu0 %v478
        %997 = vmatprep.subr.mxu0 %v487
        %998 = vmatpush1.msra.mxu0 %v486
        %999 = vmatprep.subr.mxu0 %v495
        %1000 = vmatpush1.msra.mxu0 %v494
        %1001 = vmatprep.subr.mxu0 %v503
        %1002 = vmatpush1.msra.mxu0 %v502
        %1003 = vmatprep.subr.mxu0 %v511
        %1004 = vmatpush1.msra.mxu0 %v510
        %1005 = vmatprep.subr.mxu0 %v519
        %1006 = vmatpush1.msra.mxu0 %v518
        %1007 = vmatprep.mubr.f32.mxu0 %v261
        %1008 = vmatmul.mubr.f32.gmra.mrb[0].mxu0 %v260
        %v1009 = vpop.f32.mrb[0].mxu0
        %v1010 = vadd.f32 %v607, %v1009
        %v1011 = vpop.f32.mrb[0].mxu0
        %v1012 = vadd.f32 %v611, %v1011
        %1013 = vmatprep.mubr.f32.mxu0 %v264
        %1014 = vmatmul.mubr.f32.gmra.mrb[0].mxu0 %v263
        %v1015 = vpop.f32.mrb[0].mxu0
        %v1016 = vadd.f32 %v607, %v1015
        %v1017 = vpop.f32.mrb[0].mxu0
        %v1018 = vadd.f32 %v611, %v1017
        %1019 = vdwg.mxu0
        %1020 = vmatprep.subr.mxu0 %v527
        %1021 = vmatpush1.msra.mxu0 %v526
        %1022 = vmatprep.subr.mxu0 %v535
        %1023 = vmatpush1.msra.mxu0 %v534
        %1024 = vmatprep.subr.mxu0 %v543
        %1025 = vmatpush1.msra.mxu0 %v542
        %1026 = vmatprep.subr.mxu0 %v551
        %1027 = vmatpush1.msra.mxu0 %v550
        %1028 = vmatprep.subr.mxu0 %v559
        %1029 = vmatpush1.msra.mxu0 %v558
        %1030 = vmatprep.subr.mxu0 %v567
        %1031 = vmatpush1.msra.mxu0 %v566
        %1032 = vmatprep.subr.mxu0 %v575
        %1033 = vmatpush1.msra.mxu0 %v574
        %1034 = vmatprep.subr.mxu0 %v583
        %1035 = vmatpush1.msra.mxu0 %v582
        %1036 = vmatprep.subr.mxu0 0.0
        %1037 = vmatpush1.msra.mxu0 0.0
        %1038 = vmatprep.subr.mxu0 0.0
        %1039 = vmatpush1.msra.mxu0 0.0
        %1040 = vmatprep.subr.mxu0 0.0
        %1041 = vmatpush1.msra.mxu0 0.0
        %1042 = vmatprep.subr.mxu0 0.0
        %1043 = vmatpush1.msra.mxu0 0.0
        %1044 = vmatprep.subr.mxu0 0.0
        %1045 = vmatpush1.msra.mxu0 0.0
        %1046 = vmatprep.subr.mxu0 0.0
        %1047 = vmatpush1.msra.mxu0 0.0
        %1048 = vmatprep.subr.mxu0 0.0
        %1049 = vmatpush1.msra.mxu0 0.0
        %1050 = vmatprep.subr.mxu0 0.0
        %1051 = vmatpush1.msra.mxu0 0.0
        %1052 = vmatprep.subr.mxu0 0.0
        %1053 = vmatpush1.msra.mxu0 0.0
        %1054 = vmatprep.subr.mxu0 0.0
        %1055 = vmatpush1.msra.mxu0 0.0
        %1056 = vmatprep.subr.mxu0 0.0
        %1057 = vmatpush1.msra.mxu0 0.0
        %1058 = vmatprep.subr.mxu0 0.0
        %1059 = vmatpush1.msra.mxu0 0.0
        %1060 = vmatprep.subr.mxu0 0.0
        %1061 = vmatpush1.msra.mxu0 0.0
        %1062 = vmatprep.subr.mxu0 0.0
        %1063 = vmatpush1.msra.mxu0 0.0
        %1064 = vmatprep.subr.mxu0 0.0
        %1065 = vmatpush1.msra.mxu0 0.0
        %1066 = vmatprep.subr.mxu0 0.0
        %1067 = vmatpush1.msra.mxu0 0.0
        %1068 = vmatprep.subr.mxu0 0.0
        %1069 = vmatpush1.msra.mxu0 0.0
        %1070 = vmatprep.subr.mxu0 0.0
        %1071 = vmatpush1.msra.mxu0 0.0
        %1072 = vmatprep.subr.mxu0 0.0
        %1073 = vmatpush1.msra.mxu0 0.0
        %1074 = vmatprep.subr.mxu0 0.0
        %1075 = vmatpush1.msra.mxu0 0.0
        %1076 = vmatprep.subr.mxu0 0.0
        %1077 = vmatpush1.msra.mxu0 0.0
        %1078 = vmatprep.subr.mxu0 0.0
        %1079 = vmatpush1.msra.mxu0 0.0
        %1080 = vmatprep.subr.mxu0 0.0
        %1081 = vmatpush1.msra.mxu0 0.0
        %1082 = vmatprep.subr.mxu0 0.0
        %1083 = vmatpush1.msra.mxu0 0.0
        %1084 = vmatprep.mubr.f32.mxu0 0.0
        %1085 = vmatmul.mubr.f32.gmra.mrb[0].mxu0 %v630
        %v1086 = vpop.f32.mrb[0].mxu0
        %v1087 = vadd.f32 %v1010, %v1086
        %v1088 = vpop.f32.mrb[0].mxu0
        %v1089 = vadd.f32 %v1012, %v1088
        %1090 = vmatprep.mubr.f32.mxu0 0.0
        %1091 = vmatmul.mubr.f32.gmra.mrb[0].mxu0 %v633
        %v1092 = vpop.f32.mrb[0].mxu0
        %v1093 = vadd.f32 %v1016, %v1092
        %v1094 = vpop.f32.mrb[0].mxu0
        %v1095 = vadd.f32 %v1018, %v1094
        %1096 = vdwg.mxu0
        %1097 = vmatprep.subr.mxu0 %v273
        %1098 = vmatpush1.msra.mxu0 %v272
        %1099 = vmatprep.subr.mxu0 %v281
        %1100 = vmatpush1.msra.mxu0 %v280
        %1101 = vmatprep.subr.mxu0 %v289
        %1102 = vmatpush1.msra.mxu0 %v288
        %1103 = vmatprep.subr.mxu0 %v297
        %1104 = vmatpush1.msra.mxu0 %v296
        %1105 = vmatprep.subr.mxu0 %v305
        %1106 = vmatpush1.msra.mxu0 %v304
        %1107 = vmatprep.subr.mxu0 %v313
        %1108 = vmatpush1.msra.mxu0 %v312
        %1109 = vmatprep.subr.mxu0 %v321
        %1110 = vmatpush1.msra.mxu0 %v320
        %1111 = vmatprep.subr.mxu0 %v329
        %1112 = vmatpush1.msra.mxu0 %v328
        %1113 = vmatprep.subr.mxu0 %v337
        %1114 = vmatpush1.msra.mxu0 %v336
        %1115 = vmatprep.subr.mxu0 %v345
        %1116 = vmatpush1.msra.mxu0 %v344
        %1117 = vmatprep.subr.mxu0 %v353
        %1118 = vmatpush1.msra.mxu0 %v352
        %1119 = vmatprep.subr.mxu0 %v361
        %1120 = vmatpush1.msra.mxu0 %v360
        %1121 = vmatprep.subr.mxu0 %v369
        %1122 = vmatpush1.msra.mxu0 %v368
        %1123 = vmatprep.subr.mxu0 %v377
        %1124 = vmatpush1.msra.mxu0 %v376
        %1125 = vmatprep.subr.mxu0 %v385
        %1126 = vmatpush1.msra.mxu0 %v384
        %1127 = vmatprep.subr.mxu0 %v393
        %1128 = vmatpush1.msra.mxu0 %v392
        %1129 = vmatprep.subr.mxu0 %v401
        %1130 = vmatpush1.msra.mxu0 %v400
        %1131 = vmatprep.subr.mxu0 %v409
        %1132 = vmatpush1.msra.mxu0 %v408
        %1133 = vmatprep.subr.mxu0 %v417
        %1134 = vmatpush1.msra.mxu0 %v416
        %1135 = vmatprep.subr.mxu0 %v425
        %1136 = vmatpush1.msra.mxu0 %v424
        %1137 = vmatprep.subr.mxu0 %v433
        %1138 = vmatpush1.msra.mxu0 %v432
        %1139 = vmatprep.subr.mxu0 %v441
        %1140 = vmatpush1.msra.mxu0 %v440
        %1141 = vmatprep.subr.mxu0 %v449
        %1142 = vmatpush1.msra.mxu0 %v448
        %1143 = vmatprep.subr.mxu0 %v457
        %1144 = vmatpush1.msra.mxu0 %v456
        %1145 = vmatprep.subr.mxu0 %v465
        %1146 = vmatpush1.msra.mxu0 %v464
        %1147 = vmatprep.subr.mxu0 %v473
        %1148 = vmatpush1.msra.mxu0 %v472
        %1149 = vmatprep.subr.mxu0 %v481
        %1150 = vmatpush1.msra.mxu0 %v480
        %1151 = vmatprep.subr.mxu0 %v489
        %1152 = vmatpush1.msra.mxu0 %v488
        %1153 = vmatprep.subr.mxu0 %v497
        %1154 = vmatpush1.msra.mxu0 %v496
        %1155 = vmatprep.subr.mxu0 %v505
        %1156 = vmatpush1.msra.mxu0 %v504
        %1157 = vmatprep.subr.mxu0 %v513
        %1158 = vmatpush1.msra.mxu0 %v512
        %1159 = vmatprep.subr.mxu0 %v521
        %1160 = vmatpush1.msra.mxu0 %v520
        %1161 = vmatprep.mubr.f32.mxu0 %v261
        %1162 = vmatmul.mubr.f32.gmra.mrb[0].mxu0 %v260
        %v1163 = vpop.f32.mrb[0].mxu0
        %v1164 = vadd.f32 %v615, %v1163
        %v1165 = vpop.f32.mrb[0].mxu0
        %v1166 = vadd.f32 %v619, %v1165
        %1167 = vmatprep.mubr.f32.mxu0 %v264
        %1168 = vmatmul.mubr.f32.gmra.mrb[0].mxu0 %v263
        %v1169 = vpop.f32.mrb[0].mxu0
        %v1170 = vadd.f32 %v615, %v1169
        %v1171 = vpop.f32.mrb[0].mxu0
        %v1172 = vadd.f32 %v619, %v1171
        %1173 = vdwg.mxu0
        %1174 = vmatprep.subr.mxu0 %v529
        %1175 = vmatpush1.msra.mxu0 %v528
        %1176 = vmatprep.subr.mxu0 %v537
        %1177 = vmatpush1.msra.mxu0 %v536
        %1178 = vmatprep.subr.mxu0 %v545
        %1179 = vmatpush1.msra.mxu0 %v544
        %1180 = vmatprep.subr.mxu0 %v553
        %1181 = vmatpush1.msra.mxu0 %v552
        %1182 = vmatprep.subr.mxu0 %v561
        %1183 = vmatpush1.msra.mxu0 %v560
        %1184 = vmatprep.subr.mxu0 %v569
        %1185 = vmatpush1.msra.mxu0 %v568
        %1186 = vmatprep.subr.mxu0 %v577
        %1187 = vmatpush1.msra.mxu0 %v576
        %1188 = vmatprep.subr.mxu0 %v585
        %1189 = vmatpush1.msra.mxu0 %v584
        %1190 = vmatprep.subr.mxu0 0.0
        %1191 = vmatpush1.msra.mxu0 0.0
        %1192 = vmatprep.subr.mxu0 0.0
        %1193 = vmatpush1.msra.mxu0 0.0
        %1194 = vmatprep.subr.mxu0 0.0
        %1195 = vmatpush1.msra.mxu0 0.0
        %1196 = vmatprep.subr.mxu0 0.0
        %1197 = vmatpush1.msra.mxu0 0.0
        %1198 = vmatprep.subr.mxu0 0.0
        %1199 = vmatpush1.msra.mxu0 0.0
        %1200 = vmatprep.subr.mxu0 0.0
        %1201 = vmatpush1.msra.mxu0 0.0
        %1202 = vmatprep.subr.mxu0 0.0
        %1203 = vmatpush1.msra.mxu0 0.0
        %1204 = vmatprep.subr.mxu0 0.0
        %1205 = vmatpush1.msra.mxu0 0.0
        %1206 = vmatprep.subr.mxu0 0.0
        %1207 = vmatpush1.msra.mxu0 0.0
        %1208 = vmatprep.subr.mxu0 0.0
        %1209 = vmatpush1.msra.mxu0 0.0
        %1210 = vmatprep.subr.mxu0 0.0
        %1211 = vmatpush1.msra.mxu0 0.0
        %1212 = vmatprep.subr.mxu0 0.0
        %1213 = vmatpush1.msra.mxu0 0.0
        %1214 = vmatprep.subr.mxu0 0.0
        %1215 = vmatpush1.msra.mxu0 0.0
        %1216 = vmatprep.subr.mxu0 0.0
        %1217 = vmatpush1.msra.mxu0 0.0
        %1218 = vmatprep.subr.mxu0 0.0
        %1219 = vmatpush1.msra.mxu0 0.0
        %1220 = vmatprep.subr.mxu0 0.0
        %1221 = vmatpush1.msra.mxu0 0.0
        %1222 = vmatprep.subr.mxu0 0.0
        %1223 = vmatpush1.msra.mxu0 0.0
        %1224 = vmatprep.subr.mxu0 0.0
        %1225 = vmatpush1.msra.mxu0 0.0
        %1226 = vmatprep.subr.mxu0 0.0
        %1227 = vmatpush1.msra.mxu0 0.0
        %1228 = vmatprep.subr.mxu0 0.0
        %1229 = vmatpush1.msra.mxu0 0.0
        %1230 = vmatprep.subr.mxu0 0.0
        %1231 = vmatpush1.msra.mxu0 0.0
        %1232 = vmatprep.subr.mxu0 0.0
        %1233 = vmatpush1.msra.mxu0 0.0
        %1234 = vmatprep.subr.mxu0 0.0
        %1235 = vmatpush1.msra.mxu0 0.0
        %1236 = vmatprep.subr.mxu0 0.0
        %1237 = vmatpush1.msra.mxu0 0.0
        %1238 = vmatprep.mubr.f32.mxu0 0.0
        %1239 = vmatmul.mubr.f32.gmra.mrb[0].mxu0 %v630
        %v1240 = vpop.f32.mrb[0].mxu0
        %v1241 = vadd.f32 %v1164, %v1240
        %v1242 = vpop.f32.mrb[0].mxu0
        %v1243 = vadd.f32 %v1166, %v1242
        %1244 = vmatprep.mubr.f32.mxu0 0.0
        %1245 = vmatmul.mubr.f32.gmra.mrb[0].mxu0 %v633
        %v1246 = vpop.f32.mrb[0].mxu0
        %v1247 = vadd.f32 %v1170, %v1246
        %v1248 = vpop.f32.mrb[0].mxu0
        %v1249 = vadd.f32 %v1172, %v1248
        %1250 = vdwg.mxu0
        %v1251 = vmax.f32 %v779, 0.0
        %v1252 = vmax.f32 %v781, 0.0
        %v1253 = vmax.f32 %v933, 0.0
        %v1254 = vmax.f32 %v935, 0.0
        %v1255 = vmax.f32 %v1087, 0.0
        %v1256 = vmax.f32 %v1089, 0.0
        %v1257 = vmax.f32 %v1241, 0.0
        %v1258 = vmax.f32 %v1243, 0.0
        %v1259 = vmax.f32 %v785, 0.0
        %v1260 = vmax.f32 %v787, 0.0
        %v1261 = vmax.f32 %v939, 0.0
        %v1262 = vmax.f32 %v941, 0.0
        %v1263 = vmax.f32 %v1093, 0.0
        %v1264 = vmax.f32 %v1095, 0.0
        %v1265 = vmax.f32 %v1247, 0.0
        %v1266 = vmax.f32 %v1249, 0.0
        %1267 = vst [vmem:[%s244] sm:$0xff] %v1251
        %1268 = vst [vmem:[%s244 + $0x8] sm:$0xff] %v1252
        %1269 = vst [vmem:[%s244 + $0x10] sm:$0xff] %v1253
        %1270 = vst [vmem:[%s244 + $0x18] sm:$0xff] %v1254
        %1271 = vst [vmem:[%s244 + $0x20] sm:$0xff] %v1255
        %1272 = vst [vmem:[%s244 + $0x28] sm:$0xff] %v1256
        %1273 = vst [vmem:[%s244 + $0x30] sm:$0xff] %v1257
        %1274 = vst [vmem:[%s244 + $0x38] sm:$0xff] %v1258
        %1275 = vst [vmem:[%s244 + $0x40] sm:$0xff] %v1259
        %1276 = vst [vmem:[%s244 + $0x48] sm:$0xff] %v1260
        %1277 = vst [vmem:[%s244 + $0x50] sm:$0xff] %v1261
        %1278 = vst [vmem:[%s244 + $0x58] sm:$0xff] %v1262
        %1279 = vst [vmem:[%s244 + $0x60] sm:$0xff] %v1263
        %1280 = vst [vmem:[%s244 + $0x68] sm:$0xff] %v1264
        %1281 = vst [vmem:[%s244 + $0x70] sm:$0xff] %v1265
        %1282 = vst [vmem:[%s244 + $0x78] sm:$0xff] %v1266
        %v1283 = vmax.f32 %v1251, %v1255
        %v1284 = vmax.f32 %v1252, %v1256
        %v1285 = vmax.f32 %v1253, %v1257
        %v1286 = vmax.f32 %v1254, %v1258
        %v1287 = vmax.f32 %v1259, %v1263
        %v1288 = vmax.f32 %v1260, %v1264
        %v1289 = vmax.f32 %v1261, %v1265
        %v1290 = vmax.f32 %v1262, %v1266
        %v1291 = vmax.f32 %v1283, %v1285
        %v1292 = vmax.f32 %v1284, %v1286
        %v1293 = vmax.f32 %v1287, %v1289
        %v1294 = vmax.f32 %v1288, %v1290
        %v1295 = vmax.f32 %v1291, %v1292
        %v1296 = vmax.f32 %v1293, %v1294
        %1299 = vrot.lane.b32.xlu0 %v1295, 64
        %v1300 = vpop.permute.xlu0 %1299
        %1301 = vrot.lane.b32.xlu0 %v1296, 64
        %v1302 = vpop.permute.xlu0 %1301
        %v1305 = vmax.f32 %v1295, %v1300
        %v1306 = vmax.f32 %v1296, %v1302
        %1309 = vrot.lane.b32.xlu0 %v1305, 96
        %v1310 = vpop.permute.xlu0 %1309
        %1311 = vrot.lane.b32.xlu0 %v1306, 96
        %v1312 = vpop.permute.xlu0 %1311
        %v1315 = vmax.f32 %v1305, %v1310
        %v1316 = vmax.f32 %v1306, %v1312
        %vm1317 = vcmask 261120
        %1318 = vst.msk [vmem:[%s258] sm:$0xff] %vm1317, %v1315
        %1319 = vst.msk [vmem:[%s258 + $0x8] sm:$0xff] %vm1317, %v1316
        %s1320 = sand.u32 %s99, 1
        %s1321 = scalar_lea.sflag [#allocation4], %s1320
        %s1322 = sand.u32 %s99, 1
        %s1323 = smul.addr %s1322, 128
        %s1324 = scalar_lea.vmem [#allocation8], %s1323
        %s1325 = smul.u32 2, %s23
        %p1326 = scmp.lt.s32.totalorder %s1325, 7
        %s1327 = scalar_select %p1326, %s1325, 7
        %s1328 = smul.addr %s1327, 8
        %s1329 = scalar_lea.vmem %s4, %s1328
        // Predicated region
        $region45: #{tpu_custom_call.1} parent=31 // pred_check
          %p1330 = pneg %p109
        $region46: #{tpu_custom_call.1} parent=31 // pred_check_branch
          %1332 = sbr.rel (%p1330) target = $region48
        $region47: #{tpu_custom_call.1} parent=31 // pred_region
          %s1333 = smul.u32 2, %s23
          %s1335 = ssub.s32 2048, 2048
          %1336 = vsyncadd %s1321, %s1335
          %s1337 = smul.addr %s1333, 8
          %s1338 = smul.addr %s1337, 128
          %s1339 = scalar_lea.hbm %s3, %s1338
          %s1340 = sshll.u32 %s1324, 4
          %s1341 = int_to_ptr.vmem [resolvable:$true] %s1340
          %1346 = dma.vmem_to_hbm [thread:$0]  %s1341, 2048, %s1339, %s1321, 1024, 1024, 64
        $region48: #{tpu_custom_call.1} parent=31 // pred_fallthru
          _
        // Predicated region
        $region49: #{tpu_custom_call.1} parent=31 // pred_check
          %p1347 = pneg %p135
        $region50: #{tpu_custom_call.1} parent=31 // pred_check_branch
          %1349 = sbr.rel (%p1347) target = $region52
        $region51: #{tpu_custom_call.1} parent=31 // pred_region
          %s1350 = smul.u32 2, %s23
        $region52: #{tpu_custom_call.1} parent=31 // pred_fallthru
          _
      $region32: #{tpu_custom_call.1} parent=5 // pred_fallthru
        _
      %p1351 = scmp.le.s32.totalorder 2, %s18
      // Predicated region
      $region53: #{tpu_custom_call.1} parent=5 // pred_check
        %p1352 = pneg %p1351
      $region54: #{tpu_custom_call.1} parent=5 // pred_check_branch
        %1354 = sbr.rel (%p1352) target = $region56
      $region55: #{tpu_custom_call.1} parent=5 // pred_region
        %s1355 = ssub.s32 %s18, 2
        // Predicated region
        $region57: #{tpu_custom_call.1} parent=55 // pred_check
          %p1356 = pneg %p115
        $region58: #{tpu_custom_call.1} parent=55 // pred_check_branch
          %1358 = sbr.rel (%p1356) target = $region60
        $region59: #{tpu_custom_call.1} parent=55 // pred_region
          %s1359 = sand.u32 %s100, 1
          %s1360 = scalar_lea.sflag [#allocation4], %s1359
          %s1361 = sand.u32 %s100, 1
          %s1362 = smul.addr %s1361, 128
          %s1363 = scalar_lea.vmem [#allocation8], %s1362
          %1364 = dma.done %s1360, 2048
        $region60: #{tpu_custom_call.1} parent=55 // pred_fallthru
          _
        // Predicated region
        $region61: #{tpu_custom_call.1} parent=55 // pred_check
          %p1365 = pneg %p141
        $region62: #{tpu_custom_call.1} parent=55 // pred_check_branch
          %1367 = sbr.rel (%p1365) target = $region64
        $region63: #{tpu_custom_call.1} parent=55 // pred_region
          %s1368 = smul.u32 2, %s24
          %p1369 = scmp.lt.s32.totalorder %s1368, 7
          %s1370 = scalar_select %p1369, %s1368, 7
          %s1371 = smul.addr %s1370, 8
          %s1372 = scalar_lea.vmem %s4, %s1371
        $region64: #{tpu_custom_call.1} parent=55 // pred_fallthru
          _
      $region56: #{tpu_custom_call.1} parent=5 // pred_fallthru
        _
    $region6: #{tpu_custom_call.1} parent=1 // loop_footer
      %s22 = sadd.s32 1, %s18
    $region7: #{tpu_custom_call.1} parent=1 // loop_footer_branch
      %17 = sbr.rel target = $region3
    $region8: #{tpu_custom_call.1} parent=1 // loop_exit
      _
    %1373 = vsyncpa [#allocation3], 1
    %s1374 = scalar_lea.sflag [#allocation3], 1
    %1375 = vsyncpa %s1374, 1
    %1376 = vsyncpa [#allocation6], 1
    %1377 = vsyncpa [#allocation4], 1
    %s1378 = scalar_lea.sflag [#allocation4], 1
    %1379 = vsyncpa %s1378, 1

</llo_original>
